<compile_context>
chip_gen: v7x
topology: tpu7x:2x2x1
jax: 0.10.0
libtpu: 0.0.40
codegen_flags: <defaults>
</compile_context>

<pallas_src>
import numpy as np
import jax
import jax.numpy as jnp
from jax.experimental import pallas as pl
from jax.experimental.pallas import tpu as pltpu

# ----------------------------- configuration --------------------------------
B = 2              # batch
L = 8              # sequence length (true events)
C = 8              # nb_filters == embedding dim == conv in-channels
F = C              # conv out-channels (ContinuousConv1DSim(kernel_size, nb_filters, nb_filters))
K = 3              # conv kernel_size (causal taps)
H = 8              # hidden width of the delta-t kernel network
S = 4              # len(uniform_sample)
MLP_LAYERS = [16]  # mlp_layers
T = 4              # num_types
LQ = (L - 1) * (S + 1) + 1
BLQ = B * LQ       # 72 rows, multiple of 8 -> sublane dense
HC = H * C

NEG_SLOPE = 0.1    # LeakyReLU(0.1)
SP_BETA = 100.0    # Softplus(beta=100)
SP_THRESH = 20.0   # PyTorch Softplus default threshold

# static (batch-independent) index helpers for the expanded grid
_Q = np.arange(LQ)
_ANCHOR = _Q // (S + 1)                               # most recent true event index
_OFF = _Q % (S + 1)                                   # 0 -> true event, 1..S -> simulated point
_IS_EVENT = (_OFF == 0)
_TAP = _ANCHOR[None, :] - np.arange(K)[:, None]       # (K, Lq)
_TAP_VALID = (_TAP >= 0).astype(np.float32)           # (K, Lq)
_TAP_CLIP = np.maximum(_TAP, 0)                       # (K, Lq)


def leaky_relu(x):
    return jnp.where(x >= 0, x, NEG_SLOPE * x)


def softplus100(x):
    z = SP_BETA * x
    return jnp.where(z > SP_THRESH, x,
                     jnp.log1p(jnp.exp(jnp.minimum(z, SP_THRESH))) / SP_BETA)


# --------------------- fused kernel: lambda(t) + loss -------------------------
def make_fused_kernel(n_layers):
    def kernel(*refs):
        dt_ref, ev_ref, krep_ref, tile_ref, wcat_ref = refs[:5]
        mlp_refs = refs[5:5 + 2 * n_layers]
        evsel_ref, wev_ref, wsim_ref = refs[5 + 2 * n_layers:8 + 2 * n_layers]
        lam_ref, loss_ref = refs[8 + 2 * n_layers:]

        # delta-t kernel-net weights, pre-replicated along lanes in the wrapper:
        #   kw1r[0, h*C + c] = kw1[h], kb1r[0, h*C + c] = kb1[h]
        kw1r = krep_ref[0:1, :]          # (1, HC)
        kb1r = krep_ref[1:2, :]          # (1, HC)
        tile = tile_ref[...]             # (C, HC) 0/1: replicates C channels H times

        # continuous causal conv:
        #   Zsum[bq, h*C+c] = sum_k relu(dt_k*kw1[h]+kb1[h]) * EV_k[bq, c]
        zsum = None
        evsum = None
        for k in range(K):               # K=3, fully unrolled
            dt_k = dt_ref[k]             # (BLQ, 1)
            ev_k = ev_ref[k]             # (BLQ, C)   (validity already pre-multiplied)
            h_rep = jnp.maximum(dt_k * kw1r + kb1r, 0.0)                         # (BLQ, HC)
            ev_t = jnp.dot(ev_k, tile, preferred_element_type=jnp.float32)       # (BLQ, HC)
            z_k = h_rep * ev_t
            zsum = z_k if zsum is None else zsum + z_k
            evsum = ev_k if evsum is None else evsum + ev_k

        # packed conv weights (8-aligned sublane slices of one slab):
        w2 = wcat_ref[0:HC, :]                       # (HC, F)  kw2 rearranged to [(h*C+c), f]
        kb2r = wcat_ref[HC:HC + C, :]                # (C,  F)  kb2 rearranged to [c, f]
        wskip = wcat_ref[HC + C:HC + 2 * C, :]       # (C,  F)
        bskip = wcat_ref[HC + 2 * C:HC + 2 * C + 1]  # (1,  F)

        conv = (jnp.dot(zsum, w2, preferred_element_type=jnp.float32)
                + jnp.dot(evsum, kb2r, preferred_element_type=jnp.float32)
                + jnp.dot(ev_ref[0], wskip, preferred_element_type=jnp.float32)
                + bskip)                                                         # (BLQ, F)

        x = leaky_relu(conv)
        for i in range(n_layers):
            w = mlp_refs[2 * i][...]
            b = mlp_refs[2 * i + 1][...]
            x = leaky_relu(jnp.dot(x, w, preferred_element_type=jnp.float32) + b)

        lam = softplus100(x)                                                     # (BLQ, T)
        lam_ref[...] = lam

        # fused loss reduction (stays in VMEM / vregs, no HBM round trip)
        wev = wev_ref[...]                                                       # (BLQ, 1)
        ev_lam = jnp.sum(lam * evsel_ref[...], axis=-1, keepdims=True)           # (BLQ, 1)
        nll = -jnp.log(ev_lam + 1e-8) * wev
        integ = jnp.sum(lam, axis=-1, keepdims=True) * wsim_ref[...]
        num = jnp.sum(nll) + jnp.sum(integ)
        den = jnp.sum(wev)               # == sum(non_pad_mask)
        loss_ref[0, 0] = num / den

    return kernel


def fused_forward_pallas(dt, ev, weights, evsel, wev, wsim, n_layers):
    inputs = [dt, ev] + weights + [evsel, wev, wsim]
    in_specs = [pl.BlockSpec(memory_space=pltpu.MemorySpace.VMEM) for _ in inputs]
    lam, loss = pl.pallas_call(
        make_fused_kernel(n_layers),
        in_specs=in_specs,
        out_specs=(pl.BlockSpec(memory_space=pltpu.MemorySpace.VMEM),
                   pl.BlockSpec(memory_space=pltpu.MemorySpace.SMEM)),
        out_shape=(jax.ShapeDtypeStruct((BLQ, T), jnp.float32),
                   jax.ShapeDtypeStruct((1, 1), jnp.float32)),
    )(*inputs)
    return lam, loss


# ------------------------------ wrapper prep ----------------------------------
def build_kernel_conv_inputs(times, embeddings, uniform_sample):
    """dt (K, B*LQ, 1) and validity-masked tap embeddings ev (K, B*LQ, C)."""
    u_full = jnp.concatenate([jnp.zeros((1,), jnp.float32), uniform_sample])     # (S+1,)
    frac = u_full[_OFF]                                   # (Lq,)
    nxt = np.minimum(_ANCHOR + 1, L - 1)
    t_anchor = times[:, _ANCHOR]                          # (B, Lq)
    t_next = times[:, nxt]
    tau = t_anchor + frac[None, :] * (t_next - t_anchor)  # query times (B, Lq)

    dt = tau[:, :, None] - times[:, _TAP_CLIP.T]          # (B, Lq, K)
    dt = jnp.transpose(dt, (2, 0, 1)).reshape(K, BLQ, 1).astype(jnp.float32)

    E = embeddings[:, _TAP_CLIP, :] * jnp.asarray(_TAP_VALID)[None, :, :, None]  # (B, K, Lq, C)
    ev = jnp.transpose(E, (1, 0, 2, 3)).reshape(K, BLQ, C).astype(jnp.float32)
    return dt, ev


def pack_weights(params):
    """Repack the small parameter tensors into kernel-friendly layouts."""
    kw1_rep = jnp.repeat(params["kw1"], C, axis=1)        # (1, HC): [h*C+c] = kw1[h]
    kb1_rep = jnp.repeat(params["kb1"], C, axis=1)
    krep = jnp.concatenate([kw1_rep, kb1_rep], axis=0)    # (2, HC)

    # TILE[c, h*C + c'] = (c == c'): replicates the C embedding channels H times.
    tile = jnp.asarray(np.tile(np.eye(C, dtype=np.float32), (1, H)))             # (C, HC)

    w2 = params["kw2"].reshape(H * C, F)                  # [(h*C+c), f] = kw2[h, c*F+f]
    kb2r = params["kb2"].reshape(C, F)                    # [c, f]      = kb2[0, c*F+f]
    wcat = jnp.concatenate([w2, kb2r, params["wskip"], params["bskip"]], axis=0)  # (HC+2C+1, F)

    weights = [krep, tile, wcat]
    for w, b in zip(params["mlp_w"], params["mlp_b"]):
        weights += [w, b]
    return weights


def build_loss_inputs(times, events, non_pad_mask):
    ev_idx = events - 1
    ev_idx = jnp.where(ev_idx == -1, 0, ev_idx)
    ev_onehot = jax.nn.one_hot(ev_idx, T, dtype=jnp.float32)           # (B, L, T)
    is_event = jnp.asarray(_IS_EVENT.astype(np.float32))               # (Lq,)
    evsel = ev_onehot[:, _ANCHOR, :] * is_event[None, :, None]         # (B, Lq, T)
    wev = (non_pad_mask[:, _ANCHOR] * is_event[None, :])[..., None]    # (B, Lq, 1)
    dtimes = times[:, 1:] - times[:, :-1]                              # (B, L-1)
    seg = np.minimum(_ANCHOR, L - 2)
    wsim = ((1.0 - is_event)[None, :]
            * dtimes[:, seg] / S
            * non_pad_mask[:, np.minimum(_ANCHOR + 1, L - 1)])[..., None]  # (B, Lq, 1)
    return (evsel.reshape(BLQ, T).astype(jnp.float32),
            wev.reshape(BLQ, 1).astype(jnp.float32),
            wsim.reshape(BLQ, 1).astype(jnp.float32))


def intensity_head_forward(params, times, events, embeddings, non_pad_mask, uniform_sample):
    dt, ev = build_kernel_conv_inputs(times, embeddings, uniform_sample)
    evsel, wev, wsim = build_loss_inputs(times, events, non_pad_mask)
    weights = pack_weights(params)
    lam_flat, loss = fused_forward_pallas(dt, ev, weights, evsel, wev, wsim,
                                          n_layers=len(params["mlp_w"]))
    return loss[0, 0], lam_flat.reshape(B, LQ, T)


# --------------------------- pure-JAX reference -------------------------------
def reference_forward(params, times, events, embeddings, non_pad_mask, uniform_sample):
    u_full = jnp.concatenate([jnp.zeros((1,), jnp.float32), uniform_sample])
    frac = u_full[_OFF]
    nxt = np.minimum(_ANCHOR + 1, L - 1)
    t_anchor = times[:, _ANCHOR]
    t_next = times[:, nxt]
    tau = t_anchor + frac[None, :] * (t_next - t_anchor)
    dt = tau[:, :, None] - times[:, _TAP_CLIP.T]                                  # (B,Lq,K)
    valid = jnp.asarray(_TAP_VALID.T)                                             # (Lq,K)
    E = embeddings[:, _TAP_CLIP, :]                                               # (B,K,Lq,C)

    h = jnp.maximum(dt[..., None] * params["kw1"][0] + params["kb1"][0], 0.0)     # (B,Lq,K,H)
    kv = h @ params["kw2"] + params["kb2"][0]                                     # (B,Lq,K,C*F)
    kv = kv.reshape(B, LQ, K, C, F)
    Ekl = jnp.transpose(E, (0, 2, 1, 3)) * valid[None, :, :, None]                # (B,Lq,K,C)
    conv = jnp.sum(Ekl[..., None] * kv, axis=(2, 3))                              # (B,Lq,F)
    conv = conv + E[:, 0] @ params["wskip"] + params["bskip"][0]
    x = leaky_relu(conv)
    for w, b in zip(params["mlp_w"], params["mlp_b"]):
        x = leaky_relu(x @ w + b[0])
    lam = softplus100(x)

    # loss, mirroring the PyTorch forward
    ev_idx = events - 1
    ev_idx = jnp.where(ev_idx == -1, 0, ev_idx)
    event_lam = lam[:, ::S + 1, :]                                                # (B,L,T)
    events_lambdas = jnp.take_along_axis(event_lam, ev_idx[..., None], axis=2)[..., 0]
    mask = np.ones(LQ, dtype=bool)
    mask[::S + 1] = False
    sim_idx = np.where(mask)[0]
    non_event = lam[:, sim_idx, :].reshape(B, L - 1, S, T)
    integral = non_event.sum(axis=(-2, -1)) * (times[:, 1:] - times[:, :-1]) / S
    loss = (jnp.sum(-jnp.log(events_lambdas + 1e-8) * non_pad_mask)
            + jnp.sum(integral * non_pad_mask[:, 1:]))
    loss = loss / jnp.sum(non_pad_mask)
    return loss, lam


# --------------------------------- params -------------------------------------
def init_params(key):
    ks = jax.random.split(key, 16)

    def u(k, shape, fan_in):
        bnd = 1.0 / np.sqrt(fan_in)
        return jax.random.uniform(k, shape, jnp.float32, -bnd, bnd)

    params = {
        "kw1": u(ks[0], (1, H), 1),
        "kb1": u(ks[1], (1, H), 1),
        "kw2": u(ks[2], (H, C * F), H),
        "kb2": u(ks[3], (1, C * F), H),
        "wskip": u(ks[4], (C, F), C),
        "bskip": u(ks[5], (1, F), C),
    }
    dims = [F] + MLP_LAYERS + [T]
    mlp_w, mlp_b = [], []
    for i, (din, dout) in enumerate(zip(dims[:-1], dims[1:])):
        mlp_w.append(u(ks[6 + 2 * i], (din, dout), din))
        mlp_b.append(u(ks[7 + 2 * i], (1, dout), din))
    params["mlp_w"] = mlp_w
    params["mlp_b"] = mlp_b
    return params


# ----------------------------------- main --------------------------------------
if __name__ == "__main__":
    key = jax.random.PRNGKey(0)
    kp, kt, ke, kemb, ku = jax.random.split(key, 5)
    params = init_params(kp)

    deltas = jax.random.uniform(kt, (B, L), jnp.float32, 0.1, 1.0)
    times = jnp.cumsum(deltas, axis=1)
    events = jax.random.randint(ke, (B, L), 0, T + 1).astype(jnp.int32)   # 0 = pad, 1..T = types
    embeddings = jax.random.normal(kemb, (B, L, C), jnp.float32)
    non_pad_mask = jnp.ones((B, L), jnp.float32).at[1, -2:].set(0.0)
    uniform_sample = jnp.sort(jax.random.uniform(ku, (S,), jnp.float32, 0.05, 0.95))

    loss, lam = intensity_head_forward(params, times, events, embeddings,
                                       non_pad_mask, uniform_sample)
    loss = jax.block_until_ready(loss)

    loss_ref, lam_ref = reference_forward(params, times, events, embeddings,
                                          non_pad_mask, uniform_sample)
    np.testing.assert_allclose(np.asarray(lam), np.asarray(lam_ref), rtol=2e-2, atol=2e-2)
    np.testing.assert_allclose(float(loss), float(loss_ref), rtol=2e-2, atol=2e-2)
    print("KERNEL_OK")
</pallas_src>

<mosaic_0001>
module attributes {stable_mosaic.version = 11 : i64} {
  func.func @kernel(%arg0: memref<3x72x1xf32, #tpu.memory_space<vmem>>, %arg1: memref<3x72x8xf32, #tpu.memory_space<vmem>>, %arg2: memref<2x64xf32, #tpu.memory_space<vmem>>, %arg3: memref<8x64xf32, #tpu.memory_space<vmem>>, %arg4: memref<81x8xf32, #tpu.memory_space<vmem>>, %arg5: memref<8x16xf32, #tpu.memory_space<vmem>>, %arg6: memref<1x16xf32, #tpu.memory_space<vmem>>, %arg7: memref<16x4xf32, #tpu.memory_space<vmem>>, %arg8: memref<1x4xf32, #tpu.memory_space<vmem>>, %arg9: memref<72x4xf32, #tpu.memory_space<vmem>>, %arg10: memref<72x1xf32, #tpu.memory_space<vmem>>, %arg11: memref<72x1xf32, #tpu.memory_space<vmem>>, %arg12: memref<72x4xf32, #tpu.memory_space<vmem>>, %arg13: memref<1x1xf32, #tpu.memory_space<smem>>) attributes {dimension_semantics = [], scalar_prefetch = 0 : i64, scratch_operands = 0 : i64, tpu.core_type = #tpu.core_type<tc>} {
    %c0 = arith.constant 0 : index
    %c0_0 = arith.constant 0 : index
    %0 = vector.load %arg2[%c0, %c0_0] : memref<2x64xf32, #tpu.memory_space<vmem>>, vector<1x64xf32>
    %c1 = arith.constant 1 : index
    %c0_1 = arith.constant 0 : index
    %1 = vector.load %arg2[%c1, %c0_1] : memref<2x64xf32, #tpu.memory_space<vmem>>, vector<1x64xf32>
    %c0_2 = arith.constant 0 : index
    %c0_3 = arith.constant 0 : index
    %2 = vector.load %arg3[%c0_2, %c0_3] : memref<8x64xf32, #tpu.memory_space<vmem>>, vector<8x64xf32>
    %c0_4 = arith.constant 0 : index
    %c0_5 = arith.constant 0 : index
    %c0_6 = arith.constant 0 : index
    %3 = vector.load %arg0[%c0_4, %c0_5, %c0_6] : memref<3x72x1xf32, #tpu.memory_space<vmem>>, vector<1x72x1xf32>
    %4 = vector.shape_cast %3 : vector<1x72x1xf32> to vector<72x1xf32>
    %c0_7 = arith.constant 0 : index
    %c0_8 = arith.constant 0 : index
    %c0_9 = arith.constant 0 : index
    %5 = vector.load %arg1[%c0_7, %c0_8, %c0_9] : memref<3x72x8xf32, #tpu.memory_space<vmem>>, vector<1x72x8xf32>
    %6 = vector.shape_cast %5 : vector<1x72x8xf32> to vector<72x8xf32>
    %7 = vector.broadcast %4 : vector<72x1xf32> to vector<72x64xf32>
    %8 = vector.broadcast %0 : vector<1x64xf32> to vector<72x64xf32>
    %9 = arith.mulf %7, %8 : vector<72x64xf32>
    %10 = vector.broadcast %1 : vector<1x64xf32> to vector<72x64xf32>
    %11 = arith.addf %9, %10 : vector<72x64xf32>
    %cst = arith.constant 0.000000e+00 : f32
    %12 = vector.broadcast %cst : f32 to vector<72x64xf32>
    %13 = arith.maximumf %11, %12 : vector<72x64xf32>
    %cst_10 = arith.constant dense<0.000000e+00> : vector<72x64xf32>
    %14 = tpu.matmul %6, %2, %cst_10 {dimension_numbers = #tpu.dot_dimension_numbers<[1], [0], [0], [1], [0, 0, 1, 1], [], []>} : vector<72x8xf32>, vector<8x64xf32>, vector<72x64xf32> -> vector<72x64xf32>
    %15 = arith.mulf %13, %14 : vector<72x64xf32>
    %c1_11 = arith.constant 1 : index
    %c0_12 = arith.constant 0 : index
    %c0_13 = arith.constant 0 : index
    %16 = vector.load %arg0[%c1_11, %c0_12, %c0_13] : memref<3x72x1xf32, #tpu.memory_space<vmem>>, vector<1x72x1xf32>
    %17 = vector.shape_cast %16 : vector<1x72x1xf32> to vector<72x1xf32>
    %c1_14 = arith.constant 1 : index
    %c0_15 = arith.constant 0 : index
    %c0_16 = arith.constant 0 : index
    %18 = vector.load %arg1[%c1_14, %c0_15, %c0_16] : memref<3x72x8xf32, #tpu.memory_space<vmem>>, vector<1x72x8xf32>
    %19 = vector.shape_cast %18 : vector<1x72x8xf32> to vector<72x8xf32>
    %20 = vector.broadcast %17 : vector<72x1xf32> to vector<72x64xf32>
    %21 = vector.broadcast %0 : vector<1x64xf32> to vector<72x64xf32>
    %22 = arith.mulf %20, %21 : vector<72x64xf32>
    %23 = vector.broadcast %1 : vector<1x64xf32> to vector<72x64xf32>
    %24 = arith.addf %22, %23 : vector<72x64xf32>
    %cst_17 = arith.constant 0.000000e+00 : f32
    %25 = vector.broadcast %cst_17 : f32 to vector<72x64xf32>
    %26 = arith.maximumf %24, %25 : vector<72x64xf32>
    %cst_18 = arith.constant dense<0.000000e+00> : vector<72x64xf32>
    %27 = tpu.matmul %19, %2, %cst_18 {dimension_numbers = #tpu.dot_dimension_numbers<[1], [0], [0], [1], [0, 0, 1, 1], [], []>} : vector<72x8xf32>, vector<8x64xf32>, vector<72x64xf32> -> vector<72x64xf32>
    %28 = arith.mulf %26, %27 : vector<72x64xf32>
    %29 = arith.addf %15, %28 : vector<72x64xf32>
    %30 = arith.addf %6, %19 : vector<72x8xf32>
    %c2 = arith.constant 2 : index
    %c0_19 = arith.constant 0 : index
    %c0_20 = arith.constant 0 : index
    %31 = vector.load %arg0[%c2, %c0_19, %c0_20] : memref<3x72x1xf32, #tpu.memory_space<vmem>>, vector<1x72x1xf32>
    %32 = vector.shape_cast %31 : vector<1x72x1xf32> to vector<72x1xf32>
    %c2_21 = arith.constant 2 : index
    %c0_22 = arith.constant 0 : index
    %c0_23 = arith.constant 0 : index
    %33 = vector.load %arg1[%c2_21, %c0_22, %c0_23] : memref<3x72x8xf32, #tpu.memory_space<vmem>>, vector<1x72x8xf32>
    %34 = vector.shape_cast %33 : vector<1x72x8xf32> to vector<72x8xf32>
    %35 = vector.broadcast %32 : vector<72x1xf32> to vector<72x64xf32>
    %36 = vector.broadcast %0 : vector<1x64xf32> to vector<72x64xf32>
    %37 = arith.mulf %35, %36 : vector<72x64xf32>
    %38 = vector.broadcast %1 : vector<1x64xf32> to vector<72x64xf32>
    %39 = arith.addf %37, %38 : vector<72x64xf32>
    %cst_24 = arith.constant 0.000000e+00 : f32
    %40 = vector.broadcast %cst_24 : f32 to vector<72x64xf32>
    %41 = arith.maximumf %39, %40 : vector<72x64xf32>
    %cst_25 = arith.constant dense<0.000000e+00> : vector<72x64xf32>
    %42 = tpu.matmul %34, %2, %cst_25 {dimension_numbers = #tpu.dot_dimension_numbers<[1], [0], [0], [1], [0, 0, 1, 1], [], []>} : vector<72x8xf32>, vector<8x64xf32>, vector<72x64xf32> -> vector<72x64xf32>
    %43 = arith.mulf %41, %42 : vector<72x64xf32>
    %44 = arith.addf %29, %43 : vector<72x64xf32>
    %45 = arith.addf %30, %34 : vector<72x8xf32>
    %c0_26 = arith.constant 0 : index
    %c0_27 = arith.constant 0 : index
    %46 = vector.load %arg4[%c0_26, %c0_27] : memref<81x8xf32, #tpu.memory_space<vmem>>, vector<64x8xf32>
    %c64 = arith.constant 64 : index
    %c0_28 = arith.constant 0 : index
    %47 = vector.load %arg4[%c64, %c0_28] : memref<81x8xf32, #tpu.memory_space<vmem>>, vector<8x8xf32>
    %c72 = arith.constant 72 : index
    %c0_29 = arith.constant 0 : index
    %48 = vector.load %arg4[%c72, %c0_29] : memref<81x8xf32, #tpu.memory_space<vmem>>, vector<8x8xf32>
    %c80 = arith.constant 80 : index
    %c0_30 = arith.constant 0 : index
    %49 = vector.load %arg4[%c80, %c0_30] : memref<81x8xf32, #tpu.memory_space<vmem>>, vector<1x8xf32>
    %cst_31 = arith.constant dense<0.000000e+00> : vector<72x8xf32>
    %50 = tpu.matmul %44, %46, %cst_31 {dimension_numbers = #tpu.dot_dimension_numbers<[1], [0], [0], [1], [0, 0, 1, 1], [], []>} : vector<72x64xf32>, vector<64x8xf32>, vector<72x8xf32> -> vector<72x8xf32>
    %cst_32 = arith.constant dense<0.000000e+00> : vector<72x8xf32>
    %51 = tpu.matmul %45, %47, %cst_32 {dimension_numbers = #tpu.dot_dimension_numbers<[1], [0], [0], [1], [0, 0, 1, 1], [], []>} : vector<72x8xf32>, vector<8x8xf32>, vector<72x8xf32> -> vector<72x8xf32>
    %52 = arith.addf %50, %51 : vector<72x8xf32>
    %c0_33 = arith.constant 0 : index
    %c0_34 = arith.constant 0 : index
    %c0_35 = arith.constant 0 : index
    %53 = vector.load %arg1[%c0_33, %c0_34, %c0_35] : memref<3x72x8xf32, #tpu.memory_space<vmem>>, vector<1x72x8xf32>
    %54 = vector.shape_cast %53 : vector<1x72x8xf32> to vector<72x8xf32>
    %cst_36 = arith.constant dense<0.000000e+00> : vector<72x8xf32>
    %55 = tpu.matmul %54, %48, %cst_36 {dimension_numbers = #tpu.dot_dimension_numbers<[1], [0], [0], [1], [0, 0, 1, 1], [], []>} : vector<72x8xf32>, vector<8x8xf32>, vector<72x8xf32> -> vector<72x8xf32>
    %56 = arith.addf %52, %55 : vector<72x8xf32>
    %57 = vector.broadcast %49 : vector<1x8xf32> to vector<72x8xf32>
    %58 = arith.addf %56, %57 : vector<72x8xf32>
    %cst_37 = arith.constant 0.000000e+00 : f32
    %59 = vector.broadcast %cst_37 : f32 to vector<72x8xf32>
    %60 = arith.cmpf oge, %58, %59 : vector<72x8xf32>
    %cst_38 = arith.constant 1.000000e-01 : f32
    %61 = vector.broadcast %cst_38 : f32 to vector<72x8xf32>
    %62 = arith.mulf %61, %58 : vector<72x8xf32>
    %63 = arith.select %60, %58, %62 : vector<72x8xi1>, vector<72x8xf32>
    %c0_39 = arith.constant 0 : index
    %c0_40 = arith.constant 0 : index
    %64 = vector.load %arg5[%c0_39, %c0_40] : memref<8x16xf32, #tpu.memory_space<vmem>>, vector<8x16xf32>
    %c0_41 = arith.constant 0 : index
    %c0_42 = arith.constant 0 : index
    %65 = vector.load %arg6[%c0_41, %c0_42] : memref<1x16xf32, #tpu.memory_space<vmem>>, vector<1x16xf32>
    %cst_43 = arith.constant dense<0.000000e+00> : vector<72x16xf32>
    %66 = tpu.matmul %63, %64, %cst_43 {dimension_numbers = #tpu.dot_dimension_numbers<[1], [0], [0], [1], [0, 0, 1, 1], [], []>} : vector<72x8xf32>, vector<8x16xf32>, vector<72x16xf32> -> vector<72x16xf32>
    %67 = vector.broadcast %65 : vector<1x16xf32> to vector<72x16xf32>
    %68 = arith.addf %66, %67 : vector<72x16xf32>
    %cst_44 = arith.constant 0.000000e+00 : f32
    %69 = vector.broadcast %cst_44 : f32 to vector<72x16xf32>
    %70 = arith.cmpf oge, %68, %69 : vector<72x16xf32>
    %cst_45 = arith.constant 1.000000e-01 : f32
    %71 = vector.broadcast %cst_45 : f32 to vector<72x16xf32>
    %72 = arith.mulf %71, %68 : vector<72x16xf32>
    %73 = arith.select %70, %68, %72 : vector<72x16xi1>, vector<72x16xf32>
    %c0_46 = arith.constant 0 : index
    %c0_47 = arith.constant 0 : index
    %74 = vector.load %arg7[%c0_46, %c0_47] : memref<16x4xf32, #tpu.memory_space<vmem>>, vector<16x4xf32>
    %c0_48 = arith.constant 0 : index
    %c0_49 = arith.constant 0 : index
    %75 = vector.load %arg8[%c0_48, %c0_49] : memref<1x4xf32, #tpu.memory_space<vmem>>, vector<1x4xf32>
    %cst_50 = arith.constant dense<0.000000e+00> : vector<72x4xf32>
    %76 = tpu.matmul %73, %74, %cst_50 {dimension_numbers = #tpu.dot_dimension_numbers<[1], [0], [0], [1], [0, 0, 1, 1], [], []>} : vector<72x16xf32>, vector<16x4xf32>, vector<72x4xf32> -> vector<72x4xf32>
    %77 = vector.broadcast %75 : vector<1x4xf32> to vector<72x4xf32>
    %78 = arith.addf %76, %77 : vector<72x4xf32>
    %cst_51 = arith.constant 0.000000e+00 : f32
    %79 = vector.broadcast %cst_51 : f32 to vector<72x4xf32>
    %80 = arith.cmpf oge, %78, %79 : vector<72x4xf32>
    %cst_52 = arith.constant 1.000000e-01 : f32
    %81 = vector.broadcast %cst_52 : f32 to vector<72x4xf32>
    %82 = arith.mulf %81, %78 : vector<72x4xf32>
    %83 = arith.select %80, %78, %82 : vector<72x4xi1>, vector<72x4xf32>
    %cst_53 = arith.constant 1.000000e+02 : f32
    %84 = vector.broadcast %cst_53 : f32 to vector<72x4xf32>
    %85 = arith.mulf %84, %83 : vector<72x4xf32>
    %cst_54 = arith.constant 2.000000e+01 : f32
    %86 = vector.broadcast %cst_54 : f32 to vector<72x4xf32>
    %87 = arith.cmpf ogt, %85, %86 : vector<72x4xf32>
    %cst_55 = arith.constant 2.000000e+01 : f32
    %88 = vector.broadcast %cst_55 : f32 to vector<72x4xf32>
    %89 = arith.minimumf %85, %88 : vector<72x4xf32>
    %90 = math.exp %89 : vector<72x4xf32>
    %91 = math.log1p %90 : vector<72x4xf32>
    %cst_56 = arith.constant 1.000000e+02 : f32
    %92 = vector.broadcast %cst_56 : f32 to vector<72x4xf32>
    %93 = arith.divf %91, %92 : vector<72x4xf32>
    %94 = arith.select %87, %83, %93 : vector<72x4xi1>, vector<72x4xf32>
    %c0_57 = arith.constant 0 : index
    %c0_58 = arith.constant 0 : index
    %95 = vector.load %arg12[%c0_57, %c0_58] : memref<72x4xf32, #tpu.memory_space<vmem>>, vector<72x4xf32>
    tpu.vector_store %arg12[%c0_57, %c0_58], %94 {strides = array<i32>} : memref<72x4xf32, #tpu.memory_space<vmem>>, vector<72x4xf32>,
    %c0_59 = arith.constant 0 : index
    %c0_60 = arith.constant 0 : index
    %96 = vector.load %arg10[%c0_59, %c0_60] : memref<72x1xf32, #tpu.memory_space<vmem>>, vector<72x1xf32>
    %c0_61 = arith.constant 0 : index
    %c0_62 = arith.constant 0 : index
    %97 = vector.load %arg9[%c0_61, %c0_62] : memref<72x4xf32, #tpu.memory_space<vmem>>, vector<72x4xf32>
    %98 = arith.mulf %94, %97 : vector<72x4xf32>
    %cst_63 = arith.constant dense<0.000000e+00> : vector<72xf32>
    %99 = vector.multi_reduction <add>, %98, %cst_63 [1] : vector<72x4xf32> to vector<72xf32>
    %100 = vector.shape_cast %99 : vector<72xf32> to vector<72x1xf32>
    %cst_64 = arith.constant 9.99999993E-9 : f32
    %101 = vector.broadcast %cst_64 : f32 to vector<72x1xf32>
    %102 = arith.addf %100, %101 : vector<72x1xf32>
    %103 = math.log %102 : vector<72x1xf32>
    %cst_65 = arith.constant 0.000000e+00 : f32
    %104 = vector.broadcast %cst_65 : f32 to vector<72x1xf32>
    %105 = arith.subf %104, %103 : vector<72x1xf32>
    %106 = arith.mulf %105, %96 : vector<72x1xf32>
    %cst_66 = arith.constant dense<0.000000e+00> : vector<72xf32>
    %107 = vector.multi_reduction <add>, %94, %cst_66 [1] : vector<72x4xf32> to vector<72xf32>
    %108 = vector.shape_cast %107 : vector<72xf32> to vector<72x1xf32>
    %c0_67 = arith.constant 0 : index
    %c0_68 = arith.constant 0 : index
    %109 = vector.load %arg11[%c0_67, %c0_68] : memref<72x1xf32, #tpu.memory_space<vmem>>, vector<72x1xf32>
    %110 = arith.mulf %108, %109 : vector<72x1xf32>
    %111 = vector.shape_cast %106 : vector<72x1xf32> to vector<1x72x1xf32>
    %cst_69 = arith.constant dense<0.000000e+00> : vector<1xf32>
    %112 = vector.multi_reduction <add>, %111, %cst_69 [1, 2] : vector<1x72x1xf32> to vector<1xf32>
    %113 = vector.shape_cast %112 : vector<1xf32> to vector<1x1x1xf32>
    %114 = vector.extract %113[0, 0, 0] : f32 from vector<1x1x1xf32>
    %115 = vector.shape_cast %110 : vector<72x1xf32> to vector<1x72x1xf32>
    %cst_70 = arith.constant dense<0.000000e+00> : vector<1xf32>
    %116 = vector.multi_reduction <add>, %115, %cst_70 [1, 2] : vector<1x72x1xf32> to vector<1xf32>
    %117 = vector.shape_cast %116 : vector<1xf32> to vector<1x1x1xf32>
    %118 = vector.extract %117[0, 0, 0] : f32 from vector<1x1x1xf32>
    %119 = arith.addf %114, %118 : f32
    %120 = vector.shape_cast %96 : vector<72x1xf32> to vector<1x72x1xf32>
    %cst_71 = arith.constant dense<0.000000e+00> : vector<1xf32>
    %121 = vector.multi_reduction <add>, %120, %cst_71 [1, 2] : vector<1x72x1xf32> to vector<1xf32>
    %122 = vector.shape_cast %121 : vector<1xf32> to vector<1x1x1xf32>
    %123 = vector.extract %122[0, 0, 0] : f32 from vector<1x1x1xf32>
    %124 = arith.divf %119, %123 : f32
    %c0_72 = arith.constant 0 : index
    %c0_73 = arith.constant 0 : index
    %125 = memref.load %arg13[%c0_72, %c0_73] : memref<1x1xf32, #tpu.memory_space<smem>>
    memref.store %124, %arg13[%c0_72, %c0_73] : memref<1x1xf32, #tpu.memory_space<smem>>
    return
  }
}

</mosaic_0001>

<llo_original>
// kernel: tpu_custom_call.1
$region0: #{tpu_custom_call.1}
  #allocation0 [shape = 'u32[]', space=smem, size = 0x4, offset = 0x4, fixed_abs, tag = 'smem constant byte address 0x4 - core index']
  #allocation1 [shape = 'u32[144,128]{1,0:T(1,128)}', space=vmem, size = 0x12000, scoped, tag = 'internal scratch']
  %s0 = inlined_call_operand.vmem [shape: f32[3,72,1], index: 0, kind: input, shape index: {}]
  %s1 = inlined_call_operand.vmem [shape: f32[3,72,8], index: 1, kind: input, shape index: {}]
  %s2 = inlined_call_operand.vmem [shape: f32[2,64], index: 2, kind: input, shape index: {}]
  %s3 = inlined_call_operand.vmem [shape: f32[8,64], index: 3, kind: input, shape index: {}]
  %s4 = inlined_call_operand.vmem [shape: f32[81,8], index: 4, kind: input, shape index: {}]
  %s5 = inlined_call_operand.vmem [shape: f32[8,16], index: 5, kind: input, shape index: {}]
  %s6 = inlined_call_operand.vmem [shape: f32[1,16], index: 6, kind: input, shape index: {}]
  %s7 = inlined_call_operand.vmem [shape: f32[16,4], index: 7, kind: input, shape index: {}]
  %s8 = inlined_call_operand.vmem [shape: f32[1,4], index: 8, kind: input, shape index: {}]
  %s9 = inlined_call_operand.vmem [shape: f32[72,4], index: 9, kind: input, shape index: {}]
  %s10 = inlined_call_operand.vmem [shape: f32[72,1], index: 10, kind: input, shape index: {}]
  %s11 = inlined_call_operand.vmem [shape: f32[72,1], index: 11, kind: input, shape index: {}]
  %s12 = inlined_call_operand.vmem [shape: f32[72,4], index: 12, kind: output, shape index: {0}]
  %s13 = inlined_call_operand.hbm [shape: f32[1,1], index: 13, kind: output, shape index: {1}]
  %14 = xla_tuple %s12, %s13
  %s15 = sld [smem:[#allocation0]]
  $region66: #{tpu_custom_call.1} parent=0
    _
  %s17 = ssub.s32 1, %s15
  %s18 = scalar_select 0, %s17, %s15
  $region1: #{tpu_custom_call.1} parent=0
    #allocation2 [shape = 'u8[512]{0}', space=smem, size = 0x200, scoped, tag = 'output window, operand 1, single buffered']
    #allocation3 [shape = 's32[1]{0}', space=sflag, size = 0x4, scoped, tag = 'scoped memory for tpu_custom_call.1']
    %19 = vsyncpa [#allocation3], 0
    // Predicated region
    $region2: #{tpu_custom_call.1} parent=1 // pred_check
      _
    $region3: #{tpu_custom_call.1} parent=1 // pred_check_branch
      %21 = sbr.rel (0) target = $region5
    $region4: #{tpu_custom_call.1} parent=1 // pred_region
      _
    $region5: #{tpu_custom_call.1} parent=1 // pred_fallthru
      _
    // Predicated region
    $region6: #{tpu_custom_call.1} parent=1 // pred_check
      _
    $region7: #{tpu_custom_call.1} parent=1 // pred_check_branch
      %23 = sbr.rel (0) target = $region9
    $region8: #{tpu_custom_call.1} parent=1 // pred_region
      _
    $region9: #{tpu_custom_call.1} parent=1 // pred_fallthru
      _
    // Predicated region
    $region10: #{tpu_custom_call.1} parent=1 // pred_check
      _
    $region11: #{tpu_custom_call.1} parent=1 // pred_check_branch
      %25 = sbr.rel (0) target = $region13
    $region12: #{tpu_custom_call.1} parent=1 // pred_region
      _
    $region13: #{tpu_custom_call.1} parent=1 // pred_fallthru
      _
    // Predicated region
    $region14: #{tpu_custom_call.1} parent=1 // pred_check
      _
    $region15: #{tpu_custom_call.1} parent=1 // pred_check_branch
      %27 = sbr.rel (0) target = $region17
    $region16: #{tpu_custom_call.1} parent=1 // pred_region
      _
    $region17: #{tpu_custom_call.1} parent=1 // pred_fallthru
      _
    // Predicated region
    $region18: #{tpu_custom_call.1} parent=1 // pred_check
      _
    $region19: #{tpu_custom_call.1} parent=1 // pred_check_branch
      %29 = sbr.rel (0) target = $region21
    $region20: #{tpu_custom_call.1} parent=1 // pred_region
      _
    $region21: #{tpu_custom_call.1} parent=1 // pred_fallthru
      _
    // Predicated region
    $region22: #{tpu_custom_call.1} parent=1 // pred_check
      _
    $region23: #{tpu_custom_call.1} parent=1 // pred_check_branch
      %31 = sbr.rel (0) target = $region25
    $region24: #{tpu_custom_call.1} parent=1 // pred_region
      _
    $region25: #{tpu_custom_call.1} parent=1 // pred_fallthru
      _
    // Predicated region
    $region26: #{tpu_custom_call.1} parent=1 // pred_check
      _
    $region27: #{tpu_custom_call.1} parent=1 // pred_check_branch
      %33 = sbr.rel (0) target = $region29
    $region28: #{tpu_custom_call.1} parent=1 // pred_region
      _
    $region29: #{tpu_custom_call.1} parent=1 // pred_fallthru
      _
    // Predicated region
    $region30: #{tpu_custom_call.1} parent=1 // pred_check
      _
    $region31: #{tpu_custom_call.1} parent=1 // pred_check_branch
      %35 = sbr.rel (0) target = $region33
    $region32: #{tpu_custom_call.1} parent=1 // pred_region
      _
    $region33: #{tpu_custom_call.1} parent=1 // pred_fallthru
      _
    // Predicated region
    $region34: #{tpu_custom_call.1} parent=1 // pred_check
      _
    $region35: #{tpu_custom_call.1} parent=1 // pred_check_branch
      %37 = sbr.rel (0) target = $region37
    $region36: #{tpu_custom_call.1} parent=1 // pred_region
      _
    $region37: #{tpu_custom_call.1} parent=1 // pred_fallthru
      _
    // Predicated region
    $region38: #{tpu_custom_call.1} parent=1 // pred_check
      _
    $region39: #{tpu_custom_call.1} parent=1 // pred_check_branch
      %39 = sbr.rel (0) target = $region41
    $region40: #{tpu_custom_call.1} parent=1 // pred_region
      _
    $region41: #{tpu_custom_call.1} parent=1 // pred_fallthru
      _
    // Predicated region
    $region42: #{tpu_custom_call.1} parent=1 // pred_check
      _
    $region43: #{tpu_custom_call.1} parent=1 // pred_check_branch
      %41 = sbr.rel (0) target = $region45
    $region44: #{tpu_custom_call.1} parent=1 // pred_region
      _
    $region45: #{tpu_custom_call.1} parent=1 // pred_fallthru
      _
    // Predicated region
    $region46: #{tpu_custom_call.1} parent=1 // pred_check
      _
    $region47: #{tpu_custom_call.1} parent=1 // pred_check_branch
      %43 = sbr.rel (0) target = $region49
    $region48: #{tpu_custom_call.1} parent=1 // pred_region
      _
    $region49: #{tpu_custom_call.1} parent=1 // pred_fallthru
      _
    %v44 = vld [vmem:[%s2] sm:$0x1]
    %v45 = vld [vmem:[%s2 + $0x1] sm:$0x1]
    %v46 = vld [vmem:[%s3] sm:$0xff]
    %v47 = vld [vmem:[%s0] sm:$0xff]
    %v48 = vld [vmem:[%s0 + $0x8] sm:$0xff]
    %v49 = vld [vmem:[%s0 + $0x10] sm:$0xff]
    %v50 = vld [vmem:[%s0 + $0x18] sm:$0xff]
    %v51 = vld [vmem:[%s0 + $0x20] sm:$0xff]
    %v52 = vld [vmem:[%s0 + $0x28] sm:$0xff]
    %v53 = vld [vmem:[%s0 + $0x30] sm:$0xff]
    %v54 = vld [vmem:[%s0 + $0x38] sm:$0xff]
    %v55 = vld [vmem:[%s0 + $0x40] sm:$0xff]
    %v56 = vld [vmem:[%s1] sm:$0xff]
    %v57 = vld [vmem:[%s1 + $0x8] sm:$0xff]
    %v58 = vld [vmem:[%s1 + $0x10] sm:$0xff]
    %v59 = vld [vmem:[%s1 + $0x18] sm:$0xff]
    %v60 = vld [vmem:[%s1 + $0x20] sm:$0xff]
    %v61 = vld [vmem:[%s1 + $0x28] sm:$0xff]
    %v62 = vld [vmem:[%s1 + $0x30] sm:$0xff]
    %v63 = vld [vmem:[%s1 + $0x38] sm:$0xff]
    %v64 = vld [vmem:[%s1 + $0x40] sm:$0xff]
    %66 = vset.pattern.permute.xlu0 0
    %67 = vperm.xlu0 %66, %v47
    %v68 = vpop.permute.xlu0 %67
    %71 = vset.pattern.permute.xlu0 0
    %72 = vperm.xlu0 %71, %v48
    %v73 = vpop.permute.xlu0 %72
    %76 = vset.pattern.permute.xlu0 0
    %77 = vperm.xlu0 %76, %v49
    %v78 = vpop.permute.xlu0 %77
    %81 = vset.pattern.permute.xlu0 0
    %82 = vperm.xlu0 %81, %v50
    %v83 = vpop.permute.xlu0 %82
    %86 = vset.pattern.permute.xlu0 0
    %87 = vperm.xlu0 %86, %v51
    %v88 = vpop.permute.xlu0 %87
    %91 = vset.pattern.permute.xlu0 0
    %92 = vperm.xlu0 %91, %v52
    %v93 = vpop.permute.xlu0 %92
    %96 = vset.pattern.permute.xlu0 0
    %97 = vperm.xlu0 %96, %v53
    %v98 = vpop.permute.xlu0 %97
    %101 = vset.pattern.permute.xlu0 0
    %102 = vperm.xlu0 %101, %v54
    %v103 = vpop.permute.xlu0 %102
    %106 = vset.pattern.permute.xlu0 0
    %107 = vperm.xlu0 %106, %v55
    %v108 = vpop.permute.xlu0 %107
    %v110 = vlaneseq
    %v111 = vshrl.u32 %v110, 7
    %v112 = vsub.s32 0, %v111
    %v113 = vrot.slane %v44, %v112
    %v114 = vmul.f32 %v68, %v113
    %v115 = vmul.f32 %v73, %v113
    %v116 = vmul.f32 %v78, %v113
    %v117 = vmul.f32 %v83, %v113
    %v118 = vmul.f32 %v88, %v113
    %v119 = vmul.f32 %v93, %v113
    %v120 = vmul.f32 %v98, %v113
    %v121 = vmul.f32 %v103, %v113
    %v122 = vmul.f32 %v108, %v113
    %v123 = vlaneseq
    %v124 = vshrl.u32 %v123, 7
    %v125 = vsub.s32 0, %v124
    %v126 = vrot.slane %v45, %v125
    %v127 = vadd.f32 %v114, %v126
    %v128 = vadd.f32 %v115, %v126
    %v129 = vadd.f32 %v116, %v126
    %v130 = vadd.f32 %v117, %v126
    %v131 = vadd.f32 %v118, %v126
    %v132 = vadd.f32 %v119, %v126
    %v133 = vadd.f32 %v120, %v126
    %v134 = vadd.f32 %v121, %v126
    %v135 = vadd.f32 %v122, %v126
    %v136 = vmax.f32 %v127, 0.0
    %v137 = vmax.f32 %v128, 0.0
    %v138 = vmax.f32 %v129, 0.0
    %v139 = vmax.f32 %v130, 0.0
    %v140 = vmax.f32 %v131, 0.0
    %v141 = vmax.f32 %v132, 0.0
    %v142 = vmax.f32 %v133, 0.0
    %v143 = vmax.f32 %v134, 0.0
    %v144 = vmax.f32 %v135, 0.0
    %vm145 = vcmask 64512
    %v147 = vsel %vm145, %v56, 0
    %v150 = vsel %vm145, %v57, 0
    %v153 = vsel %vm145, %v58, 0
    %v156 = vsel %vm145, %v59, 0
    %v159 = vsel %vm145, %v60, 0
    %v162 = vsel %vm145, %v61, 0
    %v165 = vsel %vm145, %v62, 0
    %v168 = vsel %vm145, %v63, 0
    %v171 = vsel %vm145, %v64, 0
    %173 = vmatprep.subr.mxu0 0.0
    %174 = vmatpush1.msra.mxu0 %v46
    %175 = vmatprep.subr.mxu0 0.0
    %176 = vmatpush1.msra.mxu0 0.0
    %177 = vmatprep.subr.mxu0 0.0
    %178 = vmatpush1.msra.mxu0 0.0
    %179 = vmatprep.subr.mxu0 0.0
    %180 = vmatpush1.msra.mxu0 0.0
    %181 = vmatprep.subr.mxu0 0.0
    %182 = vmatpush1.msra.mxu0 0.0
    %183 = vmatprep.subr.mxu0 0.0
    %184 = vmatpush1.msra.mxu0 0.0
    %185 = vmatprep.subr.mxu0 0.0
    %186 = vmatpush1.msra.mxu0 0.0
    %187 = vmatprep.subr.mxu0 0.0
    %188 = vmatpush1.msra.mxu0 0.0
    %189 = vmatprep.subr.mxu0 0.0
    %190 = vmatpush1.msra.mxu0 0.0
    %191 = vmatprep.subr.mxu0 0.0
    %192 = vmatpush1.msra.mxu0 0.0
    %193 = vmatprep.subr.mxu0 0.0
    %194 = vmatpush1.msra.mxu0 0.0
    %195 = vmatprep.subr.mxu0 0.0
    %196 = vmatpush1.msra.mxu0 0.0
    %197 = vmatprep.subr.mxu0 0.0
    %198 = vmatpush1.msra.mxu0 0.0
    %199 = vmatprep.subr.mxu0 0.0
    %200 = vmatpush1.msra.mxu0 0.0
    %201 = vmatprep.subr.mxu0 0.0
    %202 = vmatpush1.msra.mxu0 0.0
    %203 = vmatprep.subr.mxu0 0.0
    %204 = vmatpush1.msra.mxu0 0.0
    %205 = vmatprep.subr.mxu0 0.0
    %206 = vmatpush1.msra.mxu0 0.0
    %207 = vmatprep.subr.mxu0 0.0
    %208 = vmatpush1.msra.mxu0 0.0
    %209 = vmatprep.subr.mxu0 0.0
    %210 = vmatpush1.msra.mxu0 0.0
    %211 = vmatprep.subr.mxu0 0.0
    %212 = vmatpush1.msra.mxu0 0.0
    %213 = vmatprep.subr.mxu0 0.0
    %214 = vmatpush1.msra.mxu0 0.0
    %215 = vmatprep.subr.mxu0 0.0
    %216 = vmatpush1.msra.mxu0 0.0
    %217 = vmatprep.subr.mxu0 0.0
    %218 = vmatpush1.msra.mxu0 0.0
    %219 = vmatprep.subr.mxu0 0.0
    %220 = vmatpush1.msra.mxu0 0.0
    %221 = vmatprep.subr.mxu0 0.0
    %222 = vmatpush1.msra.mxu0 0.0
    %223 = vmatprep.subr.mxu0 0.0
    %224 = vmatpush1.msra.mxu0 0.0
    %225 = vmatprep.subr.mxu0 0.0
    %226 = vmatpush1.msra.mxu0 0.0
    %227 = vmatprep.subr.mxu0 0.0
    %228 = vmatpush1.msra.mxu0 0.0
    %229 = vmatprep.subr.mxu0 0.0
    %230 = vmatpush1.msra.mxu0 0.0
    %231 = vmatprep.subr.mxu0 0.0
    %232 = vmatpush1.msra.mxu0 0.0
    %233 = vmatprep.subr.mxu0 0.0
    %234 = vmatpush1.msra.mxu0 0.0
    %235 = vmatprep.subr.mxu0 0.0
    %236 = vmatpush1.msra.mxu0 0.0
    %237 = vmatprep.mubr.f32.mxu0 0.0
    %238 = vmatmul.mubr.f32.gmra.mrb[0].mxu0 %v147
    %v239 = vpop.f32.mrb[0].mxu0
    %v240 = vadd.f32 0.0, %v239
    %v241 = vpop.f32.mrb[0].mxu0
    %242 = vmatprep.mubr.f32.mxu0 0.0
    %243 = vmatmul.mubr.f32.gmra.mrb[0].mxu0 %v150
    %v244 = vpop.f32.mrb[0].mxu0
    %v245 = vadd.f32 0.0, %v244
    %v246 = vpop.f32.mrb[0].mxu0
    %247 = vmatprep.mubr.f32.mxu0 0.0
    %248 = vmatmul.mubr.f32.gmra.mrb[0].mxu0 %v153
    %v249 = vpop.f32.mrb[0].mxu0
    %v250 = vadd.f32 0.0, %v249
    %v251 = vpop.f32.mrb[0].mxu0
    %252 = vmatprep.mubr.f32.mxu0 0.0
    %253 = vmatmul.mubr.f32.gmra.mrb[0].mxu0 %v156
    %v254 = vpop.f32.mrb[0].mxu0
    %v255 = vadd.f32 0.0, %v254
    %v256 = vpop.f32.mrb[0].mxu0
    %257 = vmatprep.mubr.f32.mxu0 0.0
    %258 = vmatmul.mubr.f32.gmra.mrb[0].mxu0 %v159
    %v259 = vpop.f32.mrb[0].mxu0
    %v260 = vadd.f32 0.0, %v259
    %v261 = vpop.f32.mrb[0].mxu0
    %262 = vmatprep.mubr.f32.mxu0 0.0
    %263 = vmatmul.mubr.f32.gmra.mrb[0].mxu0 %v162
    %v264 = vpop.f32.mrb[0].mxu0
    %v265 = vadd.f32 0.0, %v264
    %v266 = vpop.f32.mrb[0].mxu0
    %267 = vmatprep.mubr.f32.mxu0 0.0
    %268 = vmatmul.mubr.f32.gmra.mrb[0].mxu0 %v165
    %v269 = vpop.f32.mrb[0].mxu0
    %v270 = vadd.f32 0.0, %v269
    %v271 = vpop.f32.mrb[0].mxu0
    %272 = vmatprep.mubr.f32.mxu0 0.0
    %273 = vmatmul.mubr.f32.gmra.mrb[0].mxu0 %v168
    %v274 = vpop.f32.mrb[0].mxu0
    %v275 = vadd.f32 0.0, %v274
    %v276 = vpop.f32.mrb[0].mxu0
    %277 = vmatprep.mubr.f32.mxu0 0.0
    %278 = vmatmul.mubr.f32.gmra.mrb[0].mxu0 %v171
    %v279 = vpop.f32.mrb[0].mxu0
    %v280 = vadd.f32 0.0, %v279
    %v281 = vpop.f32.mrb[0].mxu0
    %282 = vdwg.mxu0
    %v283 = vmul.f32 %v136, %v240
    %v284 = vmul.f32 %v137, %v245
    %v285 = vmul.f32 %v138, %v250
    %v286 = vmul.f32 %v139, %v255
    %v287 = vmul.f32 %v140, %v260
    %v288 = vmul.f32 %v141, %v265
    %v289 = vmul.f32 %v142, %v270
    %v290 = vmul.f32 %v143, %v275
    %v291 = vmul.f32 %v144, %v280
    %s292 = scalar_lea.vmem %s0, 72
    %v293 = vld [vmem:[%s292] sm:$0xff]
    %v294 = vld [vmem:[%s292 + $0x8] sm:$0xff]
    %v295 = vld [vmem:[%s292 + $0x10] sm:$0xff]
    %v296 = vld [vmem:[%s292 + $0x18] sm:$0xff]
    %v297 = vld [vmem:[%s292 + $0x20] sm:$0xff]
    %v298 = vld [vmem:[%s292 + $0x28] sm:$0xff]
    %v299 = vld [vmem:[%s292 + $0x30] sm:$0xff]
    %v300 = vld [vmem:[%s292 + $0x38] sm:$0xff]
    %v301 = vld [vmem:[%s292 + $0x40] sm:$0xff]
    %s302 = scalar_lea.vmem %s1, 72
    %v303 = vld [vmem:[%s302] sm:$0xff]
    %v304 = vld [vmem:[%s302 + $0x8] sm:$0xff]
    %v305 = vld [vmem:[%s302 + $0x10] sm:$0xff]
    %v306 = vld [vmem:[%s302 + $0x18] sm:$0xff]
    %v307 = vld [vmem:[%s302 + $0x20] sm:$0xff]
    %v308 = vld [vmem:[%s302 + $0x28] sm:$0xff]
    %v309 = vld [vmem:[%s302 + $0x30] sm:$0xff]
    %v310 = vld [vmem:[%s302 + $0x38] sm:$0xff]
    %v311 = vld [vmem:[%s302 + $0x40] sm:$0xff]
    %313 = vset.pattern.permute.xlu0 0
    %314 = vperm.xlu0 %313, %v293
    %v315 = vpop.permute.xlu0 %314
    %318 = vset.pattern.permute.xlu0 0
    %319 = vperm.xlu0 %318, %v294
    %v320 = vpop.permute.xlu0 %319
    %323 = vset.pattern.permute.xlu0 0
    %324 = vperm.xlu0 %323, %v295
    %v325 = vpop.permute.xlu0 %324
    %328 = vset.pattern.permute.xlu0 0
    %329 = vperm.xlu0 %328, %v296
    %v330 = vpop.permute.xlu0 %329
    %333 = vset.pattern.permute.xlu0 0
    %334 = vperm.xlu0 %333, %v297
    %v335 = vpop.permute.xlu0 %334
    %338 = vset.pattern.permute.xlu0 0
    %339 = vperm.xlu0 %338, %v298
    %v340 = vpop.permute.xlu0 %339
    %343 = vset.pattern.permute.xlu0 0
    %344 = vperm.xlu0 %343, %v299
    %v345 = vpop.permute.xlu0 %344
    %348 = vset.pattern.permute.xlu0 0
    %349 = vperm.xlu0 %348, %v300
    %v350 = vpop.permute.xlu0 %349
    %353 = vset.pattern.permute.xlu0 0
    %354 = vperm.xlu0 %353, %v301
    %v355 = vpop.permute.xlu0 %354
    %v357 = vmul.f32 %v315, %v113
    %v358 = vmul.f32 %v320, %v113
    %v359 = vmul.f32 %v325, %v113
    %v360 = vmul.f32 %v330, %v113
    %v361 = vmul.f32 %v335, %v113
    %v362 = vmul.f32 %v340, %v113
    %v363 = vmul.f32 %v345, %v113
    %v364 = vmul.f32 %v350, %v113
    %v365 = vmul.f32 %v355, %v113
    %v366 = vadd.f32 %v357, %v126
    %v367 = vadd.f32 %v358, %v126
    %v368 = vadd.f32 %v359, %v126
    %v369 = vadd.f32 %v360, %v126
    %v370 = vadd.f32 %v361, %v126
    %v371 = vadd.f32 %v362, %v126
    %v372 = vadd.f32 %v363, %v126
    %v373 = vadd.f32 %v364, %v126
    %v374 = vadd.f32 %v365, %v126
    %v375 = vmax.f32 %v366, 0.0
    %v376 = vmax.f32 %v367, 0.0
    %v377 = vmax.f32 %v368, 0.0
    %v378 = vmax.f32 %v369, 0.0
    %v379 = vmax.f32 %v370, 0.0
    %v380 = vmax.f32 %v371, 0.0
    %v381 = vmax.f32 %v372, 0.0
    %v382 = vmax.f32 %v373, 0.0
    %v383 = vmax.f32 %v374, 0.0
    %v385 = vsel %vm145, %v303, 0
    %v388 = vsel %vm145, %v304, 0
    %v391 = vsel %vm145, %v305, 0
    %v394 = vsel %vm145, %v306, 0
    %v397 = vsel %vm145, %v307, 0
    %v400 = vsel %vm145, %v308, 0
    %v403 = vsel %vm145, %v309, 0
    %v406 = vsel %vm145, %v310, 0
    %v409 = vsel %vm145, %v311, 0
    %411 = vmatprep.subr.mxu0 0.0
    %412 = vmatpush1.msra.mxu0 %v46
    %413 = vmatprep.subr.mxu0 0.0
    %414 = vmatpush1.msra.mxu0 0.0
    %415 = vmatprep.subr.mxu0 0.0
    %416 = vmatpush1.msra.mxu0 0.0
    %417 = vmatprep.subr.mxu0 0.0
    %418 = vmatpush1.msra.mxu0 0.0
    %419 = vmatprep.subr.mxu0 0.0
    %420 = vmatpush1.msra.mxu0 0.0
    %421 = vmatprep.subr.mxu0 0.0
    %422 = vmatpush1.msra.mxu0 0.0
    %423 = vmatprep.subr.mxu0 0.0
    %424 = vmatpush1.msra.mxu0 0.0
    %425 = vmatprep.subr.mxu0 0.0
    %426 = vmatpush1.msra.mxu0 0.0
    %427 = vmatprep.subr.mxu0 0.0
    %428 = vmatpush1.msra.mxu0 0.0
    %429 = vmatprep.subr.mxu0 0.0
    %430 = vmatpush1.msra.mxu0 0.0
    %431 = vmatprep.subr.mxu0 0.0
    %432 = vmatpush1.msra.mxu0 0.0
    %433 = vmatprep.subr.mxu0 0.0
    %434 = vmatpush1.msra.mxu0 0.0
    %435 = vmatprep.subr.mxu0 0.0
    %436 = vmatpush1.msra.mxu0 0.0
    %437 = vmatprep.subr.mxu0 0.0
    %438 = vmatpush1.msra.mxu0 0.0
    %439 = vmatprep.subr.mxu0 0.0
    %440 = vmatpush1.msra.mxu0 0.0
    %441 = vmatprep.subr.mxu0 0.0
    %442 = vmatpush1.msra.mxu0 0.0
    %443 = vmatprep.subr.mxu0 0.0
    %444 = vmatpush1.msra.mxu0 0.0
    %445 = vmatprep.subr.mxu0 0.0
    %446 = vmatpush1.msra.mxu0 0.0
    %447 = vmatprep.subr.mxu0 0.0
    %448 = vmatpush1.msra.mxu0 0.0
    %449 = vmatprep.subr.mxu0 0.0
    %450 = vmatpush1.msra.mxu0 0.0
    %451 = vmatprep.subr.mxu0 0.0
    %452 = vmatpush1.msra.mxu0 0.0
    %453 = vmatprep.subr.mxu0 0.0
    %454 = vmatpush1.msra.mxu0 0.0
    %455 = vmatprep.subr.mxu0 0.0
    %456 = vmatpush1.msra.mxu0 0.0
    %457 = vmatprep.subr.mxu0 0.0
    %458 = vmatpush1.msra.mxu0 0.0
    %459 = vmatprep.subr.mxu0 0.0
    %460 = vmatpush1.msra.mxu0 0.0
    %461 = vmatprep.subr.mxu0 0.0
    %462 = vmatpush1.msra.mxu0 0.0
    %463 = vmatprep.subr.mxu0 0.0
    %464 = vmatpush1.msra.mxu0 0.0
    %465 = vmatprep.subr.mxu0 0.0
    %466 = vmatpush1.msra.mxu0 0.0
    %467 = vmatprep.subr.mxu0 0.0
    %468 = vmatpush1.msra.mxu0 0.0
    %469 = vmatprep.subr.mxu0 0.0
    %470 = vmatpush1.msra.mxu0 0.0
    %471 = vmatprep.subr.mxu0 0.0
    %472 = vmatpush1.msra.mxu0 0.0
    %473 = vmatprep.subr.mxu0 0.0
    %474 = vmatpush1.msra.mxu0 0.0
    %475 = vmatprep.mubr.f32.mxu0 0.0
    %476 = vmatmul.mubr.f32.gmra.mrb[0].mxu0 %v385
    %v477 = vpop.f32.mrb[0].mxu0
    %v478 = vadd.f32 0.0, %v477
    %v479 = vpop.f32.mrb[0].mxu0
    %480 = vmatprep.mubr.f32.mxu0 0.0
    %481 = vmatmul.mubr.f32.gmra.mrb[0].mxu0 %v388
    %v482 = vpop.f32.mrb[0].mxu0
    %v483 = vadd.f32 0.0, %v482
    %v484 = vpop.f32.mrb[0].mxu0
    %485 = vmatprep.mubr.f32.mxu0 0.0
    %486 = vmatmul.mubr.f32.gmra.mrb[0].mxu0 %v391
    %v487 = vpop.f32.mrb[0].mxu0
    %v488 = vadd.f32 0.0, %v487
    %v489 = vpop.f32.mrb[0].mxu0
    %490 = vmatprep.mubr.f32.mxu0 0.0
    %491 = vmatmul.mubr.f32.gmra.mrb[0].mxu0 %v394
    %v492 = vpop.f32.mrb[0].mxu0
    %v493 = vadd.f32 0.0, %v492
    %v494 = vpop.f32.mrb[0].mxu0
    %495 = vmatprep.mubr.f32.mxu0 0.0
    %496 = vmatmul.mubr.f32.gmra.mrb[0].mxu0 %v397
    %v497 = vpop.f32.mrb[0].mxu0
    %v498 = vadd.f32 0.0, %v497
    %v499 = vpop.f32.mrb[0].mxu0
    %500 = vmatprep.mubr.f32.mxu0 0.0
    %501 = vmatmul.mubr.f32.gmra.mrb[0].mxu0 %v400
    %v502 = vpop.f32.mrb[0].mxu0
    %v503 = vadd.f32 0.0, %v502
    %v504 = vpop.f32.mrb[0].mxu0
    %505 = vmatprep.mubr.f32.mxu0 0.0
    %506 = vmatmul.mubr.f32.gmra.mrb[0].mxu0 %v403
    %v507 = vpop.f32.mrb[0].mxu0
    %v508 = vadd.f32 0.0, %v507
    %v509 = vpop.f32.mrb[0].mxu0
    %510 = vmatprep.mubr.f32.mxu0 0.0
    %511 = vmatmul.mubr.f32.gmra.mrb[0].mxu0 %v406
    %v512 = vpop.f32.mrb[0].mxu0
    %v513 = vadd.f32 0.0, %v512
    %v514 = vpop.f32.mrb[0].mxu0
    %515 = vmatprep.mubr.f32.mxu0 0.0
    %516 = vmatmul.mubr.f32.gmra.mrb[0].mxu0 %v409
    %v517 = vpop.f32.mrb[0].mxu0
    %v518 = vadd.f32 0.0, %v517
    %v519 = vpop.f32.mrb[0].mxu0
    %520 = vdwg.mxu0
    %v521 = vmul.f32 %v375, %v478
    %v522 = vmul.f32 %v376, %v483
    %v523 = vmul.f32 %v377, %v488
    %v524 = vmul.f32 %v378, %v493
    %v525 = vmul.f32 %v379, %v498
    %v526 = vmul.f32 %v380, %v503
    %v527 = vmul.f32 %v381, %v508
    %v528 = vmul.f32 %v382, %v513
    %v529 = vmul.f32 %v383, %v518
    %v530 = vadd.f32 %v283, %v521
    %v531 = vadd.f32 %v284, %v522
    %v532 = vadd.f32 %v285, %v523
    %v533 = vadd.f32 %v286, %v524
    %v534 = vadd.f32 %v287, %v525
    %v535 = vadd.f32 %v288, %v526
    %v536 = vadd.f32 %v289, %v527
    %v537 = vadd.f32 %v290, %v528
    %v538 = vadd.f32 %v291, %v529
    %v539 = vadd.f32 %v56, %v303
    %v540 = vadd.f32 %v57, %v304
    %v541 = vadd.f32 %v58, %v305
    %v542 = vadd.f32 %v59, %v306
    %v543 = vadd.f32 %v60, %v307
    %v544 = vadd.f32 %v61, %v308
    %v545 = vadd.f32 %v62, %v309
    %v546 = vadd.f32 %v63, %v310
    %v547 = vadd.f32 %v64, %v311
    %s548 = scalar_lea.vmem %s0, 144
    %v549 = vld [vmem:[%s548] sm:$0xff]
    %v550 = vld [vmem:[%s548 + $0x8] sm:$0xff]
    %v551 = vld [vmem:[%s548 + $0x10] sm:$0xff]
    %v552 = vld [vmem:[%s548 + $0x18] sm:$0xff]
    %v553 = vld [vmem:[%s548 + $0x20] sm:$0xff]
    %v554 = vld [vmem:[%s548 + $0x28] sm:$0xff]
    %v555 = vld [vmem:[%s548 + $0x30] sm:$0xff]
    %v556 = vld [vmem:[%s548 + $0x38] sm:$0xff]
    %v557 = vld [vmem:[%s548 + $0x40] sm:$0xff]
    %s558 = scalar_lea.vmem %s1, 144
    %v559 = vld [vmem:[%s558] sm:$0xff]
    %v560 = vld [vmem:[%s558 + $0x8] sm:$0xff]
    %v561 = vld [vmem:[%s558 + $0x10] sm:$0xff]
    %v562 = vld [vmem:[%s558 + $0x18] sm:$0xff]
    %v563 = vld [vmem:[%s558 + $0x20] sm:$0xff]
    %v564 = vld [vmem:[%s558 + $0x28] sm:$0xff]
    %v565 = vld [vmem:[%s558 + $0x30] sm:$0xff]
    %v566 = vld [vmem:[%s558 + $0x38] sm:$0xff]
    %v567 = vld [vmem:[%s558 + $0x40] sm:$0xff]
    %569 = vset.pattern.permute.xlu0 0
    %570 = vperm.xlu0 %569, %v549
    %v571 = vpop.permute.xlu0 %570
    %574 = vset.pattern.permute.xlu0 0
    %575 = vperm.xlu0 %574, %v550
    %v576 = vpop.permute.xlu0 %575
    %579 = vset.pattern.permute.xlu0 0
    %580 = vperm.xlu0 %579, %v551
    %v581 = vpop.permute.xlu0 %580
    %584 = vset.pattern.permute.xlu0 0
    %585 = vperm.xlu0 %584, %v552
    %v586 = vpop.permute.xlu0 %585
    %589 = vset.pattern.permute.xlu0 0
    %590 = vperm.xlu0 %589, %v553
    %v591 = vpop.permute.xlu0 %590
    %594 = vset.pattern.permute.xlu0 0
    %595 = vperm.xlu0 %594, %v554
    %v596 = vpop.permute.xlu0 %595
    %599 = vset.pattern.permute.xlu0 0
    %600 = vperm.xlu0 %599, %v555
    %v601 = vpop.permute.xlu0 %600
    %604 = vset.pattern.permute.xlu0 0
    %605 = vperm.xlu0 %604, %v556
    %v606 = vpop.permute.xlu0 %605
    %609 = vset.pattern.permute.xlu0 0
    %610 = vperm.xlu0 %609, %v557
    %v611 = vpop.permute.xlu0 %610
    %v613 = vmul.f32 %v571, %v113
    %v614 = vmul.f32 %v576, %v113
    %v615 = vmul.f32 %v581, %v113
    %v616 = vmul.f32 %v586, %v113
    %v617 = vmul.f32 %v591, %v113
    %v618 = vmul.f32 %v596, %v113
    %v619 = vmul.f32 %v601, %v113
    %v620 = vmul.f32 %v606, %v113
    %v621 = vmul.f32 %v611, %v113
    %v622 = vadd.f32 %v613, %v126
    %v623 = vadd.f32 %v614, %v126
    %v624 = vadd.f32 %v615, %v126
    %v625 = vadd.f32 %v616, %v126
    %v626 = vadd.f32 %v617, %v126
    %v627 = vadd.f32 %v618, %v126
    %v628 = vadd.f32 %v619, %v126
    %v629 = vadd.f32 %v620, %v126
    %v630 = vadd.f32 %v621, %v126
    %v631 = vmax.f32 %v622, 0.0
    %v632 = vmax.f32 %v623, 0.0
    %v633 = vmax.f32 %v624, 0.0
    %v634 = vmax.f32 %v625, 0.0
    %v635 = vmax.f32 %v626, 0.0
    %v636 = vmax.f32 %v627, 0.0
    %v637 = vmax.f32 %v628, 0.0
    %v638 = vmax.f32 %v629, 0.0
    %v639 = vmax.f32 %v630, 0.0
    %v641 = vsel %vm145, %v559, 0
    %v644 = vsel %vm145, %v560, 0
    %v647 = vsel %vm145, %v561, 0
    %v650 = vsel %vm145, %v562, 0
    %v653 = vsel %vm145, %v563, 0
    %v656 = vsel %vm145, %v564, 0
    %v659 = vsel %vm145, %v565, 0
    %v662 = vsel %vm145, %v566, 0
    %v665 = vsel %vm145, %v567, 0
    %667 = vmatprep.subr.mxu0 0.0
    %668 = vmatpush1.msra.mxu0 %v46
    %669 = vmatprep.subr.mxu0 0.0
    %670 = vmatpush1.msra.mxu0 0.0
    %671 = vmatprep.subr.mxu0 0.0
    %672 = vmatpush1.msra.mxu0 0.0
    %673 = vmatprep.subr.mxu0 0.0
    %674 = vmatpush1.msra.mxu0 0.0
    %675 = vmatprep.subr.mxu0 0.0
    %676 = vmatpush1.msra.mxu0 0.0
    %677 = vmatprep.subr.mxu0 0.0
    %678 = vmatpush1.msra.mxu0 0.0
    %679 = vmatprep.subr.mxu0 0.0
    %680 = vmatpush1.msra.mxu0 0.0
    %681 = vmatprep.subr.mxu0 0.0
    %682 = vmatpush1.msra.mxu0 0.0
    %683 = vmatprep.subr.mxu0 0.0
    %684 = vmatpush1.msra.mxu0 0.0
    %685 = vmatprep.subr.mxu0 0.0
    %686 = vmatpush1.msra.mxu0 0.0
    %687 = vmatprep.subr.mxu0 0.0
    %688 = vmatpush1.msra.mxu0 0.0
    %689 = vmatprep.subr.mxu0 0.0
    %690 = vmatpush1.msra.mxu0 0.0
    %691 = vmatprep.subr.mxu0 0.0
    %692 = vmatpush1.msra.mxu0 0.0
    %693 = vmatprep.subr.mxu0 0.0
    %694 = vmatpush1.msra.mxu0 0.0
    %695 = vmatprep.subr.mxu0 0.0
    %696 = vmatpush1.msra.mxu0 0.0
    %697 = vmatprep.subr.mxu0 0.0
    %698 = vmatpush1.msra.mxu0 0.0
    %699 = vmatprep.subr.mxu0 0.0
    %700 = vmatpush1.msra.mxu0 0.0
    %701 = vmatprep.subr.mxu0 0.0
    %702 = vmatpush1.msra.mxu0 0.0
    %703 = vmatprep.subr.mxu0 0.0
    %704 = vmatpush1.msra.mxu0 0.0
    %705 = vmatprep.subr.mxu0 0.0
    %706 = vmatpush1.msra.mxu0 0.0
    %707 = vmatprep.subr.mxu0 0.0
    %708 = vmatpush1.msra.mxu0 0.0
    %709 = vmatprep.subr.mxu0 0.0
    %710 = vmatpush1.msra.mxu0 0.0
    %711 = vmatprep.subr.mxu0 0.0
    %712 = vmatpush1.msra.mxu0 0.0
    %713 = vmatprep.subr.mxu0 0.0
    %714 = vmatpush1.msra.mxu0 0.0
    %715 = vmatprep.subr.mxu0 0.0
    %716 = vmatpush1.msra.mxu0 0.0
    %717 = vmatprep.subr.mxu0 0.0
    %718 = vmatpush1.msra.mxu0 0.0
    %719 = vmatprep.subr.mxu0 0.0
    %720 = vmatpush1.msra.mxu0 0.0
    %721 = vmatprep.subr.mxu0 0.0
    %722 = vmatpush1.msra.mxu0 0.0
    %723 = vmatprep.subr.mxu0 0.0
    %724 = vmatpush1.msra.mxu0 0.0
    %725 = vmatprep.subr.mxu0 0.0
    %726 = vmatpush1.msra.mxu0 0.0
    %727 = vmatprep.subr.mxu0 0.0
    %728 = vmatpush1.msra.mxu0 0.0
    %729 = vmatprep.subr.mxu0 0.0
    %730 = vmatpush1.msra.mxu0 0.0
    %731 = vmatprep.mubr.f32.mxu0 0.0
    %732 = vmatmul.mubr.f32.gmra.mrb[0].mxu0 %v641
    %v733 = vpop.f32.mrb[0].mxu0
    %v734 = vadd.f32 0.0, %v733
    %v735 = vpop.f32.mrb[0].mxu0
    %736 = vmatprep.mubr.f32.mxu0 0.0
    %737 = vmatmul.mubr.f32.gmra.mrb[0].mxu0 %v644
    %v738 = vpop.f32.mrb[0].mxu0
    %v739 = vadd.f32 0.0, %v738
    %v740 = vpop.f32.mrb[0].mxu0
    %741 = vmatprep.mubr.f32.mxu0 0.0
    %742 = vmatmul.mubr.f32.gmra.mrb[0].mxu0 %v647
    %v743 = vpop.f32.mrb[0].mxu0
    %v744 = vadd.f32 0.0, %v743
    %v745 = vpop.f32.mrb[0].mxu0
    %746 = vmatprep.mubr.f32.mxu0 0.0
    %747 = vmatmul.mubr.f32.gmra.mrb[0].mxu0 %v650
    %v748 = vpop.f32.mrb[0].mxu0
    %v749 = vadd.f32 0.0, %v748
    %v750 = vpop.f32.mrb[0].mxu0
    %751 = vmatprep.mubr.f32.mxu0 0.0
    %752 = vmatmul.mubr.f32.gmra.mrb[0].mxu0 %v653
    %v753 = vpop.f32.mrb[0].mxu0
    %v754 = vadd.f32 0.0, %v753
    %v755 = vpop.f32.mrb[0].mxu0
    %756 = vmatprep.mubr.f32.mxu0 0.0
    %757 = vmatmul.mubr.f32.gmra.mrb[0].mxu0 %v656
    %v758 = vpop.f32.mrb[0].mxu0
    %v759 = vadd.f32 0.0, %v758
    %v760 = vpop.f32.mrb[0].mxu0
    %761 = vmatprep.mubr.f32.mxu0 0.0
    %762 = vmatmul.mubr.f32.gmra.mrb[0].mxu0 %v659
    %v763 = vpop.f32.mrb[0].mxu0
    %v764 = vadd.f32 0.0, %v763
    %v765 = vpop.f32.mrb[0].mxu0
    %766 = vmatprep.mubr.f32.mxu0 0.0
    %767 = vmatmul.mubr.f32.gmra.mrb[0].mxu0 %v662
    %v768 = vpop.f32.mrb[0].mxu0
    %v769 = vadd.f32 0.0, %v768
    %v770 = vpop.f32.mrb[0].mxu0
    %771 = vmatprep.mubr.f32.mxu0 0.0
    %772 = vmatmul.mubr.f32.gmra.mrb[0].mxu0 %v665
    %v773 = vpop.f32.mrb[0].mxu0
    %v774 = vadd.f32 0.0, %v773
    %v775 = vpop.f32.mrb[0].mxu0
    %776 = vdwg.mxu0
    %v777 = vmul.f32 %v631, %v734
    %v778 = vmul.f32 %v632, %v739
    %v779 = vmul.f32 %v633, %v744
    %v780 = vmul.f32 %v634, %v749
    %v781 = vmul.f32 %v635, %v754
    %v782 = vmul.f32 %v636, %v759
    %v783 = vmul.f32 %v637, %v764
    %v784 = vmul.f32 %v638, %v769
    %v785 = vmul.f32 %v639, %v774
    %v786 = vadd.f32 %v530, %v777
    %v787 = vadd.f32 %v531, %v778
    %v788 = vadd.f32 %v532, %v779
    %v789 = vadd.f32 %v533, %v780
    %v790 = vadd.f32 %v534, %v781
    %v791 = vadd.f32 %v535, %v782
    %v792 = vadd.f32 %v536, %v783
    %v793 = vadd.f32 %v537, %v784
    %v794 = vadd.f32 %v538, %v785
    %v795 = vadd.f32 %v539, %v559
    %v796 = vadd.f32 %v540, %v560
    %v797 = vadd.f32 %v541, %v561
    %v798 = vadd.f32 %v542, %v562
    %v799 = vadd.f32 %v543, %v563
    %v800 = vadd.f32 %v544, %v564
    %v801 = vadd.f32 %v545, %v565
    %v802 = vadd.f32 %v546, %v566
    %v803 = vadd.f32 %v547, %v567
    %v804 = vld [vmem:[%s4] sm:$0xff]
    %v805 = vld [vmem:[%s4 + $0x8] sm:$0xff]
    %v806 = vld [vmem:[%s4 + $0x10] sm:$0xff]
    %v807 = vld [vmem:[%s4 + $0x18] sm:$0xff]
    %v808 = vld [vmem:[%s4 + $0x20] sm:$0xff]
    %v809 = vld [vmem:[%s4 + $0x28] sm:$0xff]
    %v810 = vld [vmem:[%s4 + $0x30] sm:$0xff]
    %v811 = vld [vmem:[%s4 + $0x38] sm:$0xff]
    %v812 = vld [vmem:[%s4 + $0x40] sm:$0xff]
    %v813 = vld [vmem:[%s4 + $0x48] sm:$0xff]
    %v814 = vld [vmem:[%s4 + $0x50] sm:$0x1]
    %v816 = vsel %vm145, %v795, 0
    %v819 = vsel %vm145, %v796, 0
    %v822 = vsel %vm145, %v797, 0
    %v825 = vsel %vm145, %v798, 0
    %v828 = vsel %vm145, %v799, 0
    %v831 = vsel %vm145, %v800, 0
    %v834 = vsel %vm145, %v801, 0
    %v837 = vsel %vm145, %v802, 0
    %v840 = vsel %vm145, %v803, 0
    %842 = vmatprep.subr.mxu0 0.0
    %843 = vmatpush1.msra.mxu0 %v812
    %844 = vmatprep.subr.mxu0 0.0
    %845 = vmatpush1.msra.mxu0 0.0
    %846 = vmatprep.subr.mxu0 0.0
    %847 = vmatpush1.msra.mxu0 0.0
    %848 = vmatprep.subr.mxu0 0.0
    %849 = vmatpush1.msra.mxu0 0.0
    %850 = vmatprep.subr.mxu0 0.0
    %851 = vmatpush1.msra.mxu0 0.0
    %852 = vmatprep.subr.mxu0 0.0
    %853 = vmatpush1.msra.mxu0 0.0
    %854 = vmatprep.subr.mxu0 0.0
    %855 = vmatpush1.msra.mxu0 0.0
    %856 = vmatprep.subr.mxu0 0.0
    %857 = vmatpush1.msra.mxu0 0.0
    %858 = vmatprep.subr.mxu0 0.0
    %859 = vmatpush1.msra.mxu0 0.0
    %860 = vmatprep.subr.mxu0 0.0
    %861 = vmatpush1.msra.mxu0 0.0
    %862 = vmatprep.subr.mxu0 0.0
    %863 = vmatpush1.msra.mxu0 0.0
    %864 = vmatprep.subr.mxu0 0.0
    %865 = vmatpush1.msra.mxu0 0.0
    %866 = vmatprep.subr.mxu0 0.0
    %867 = vmatpush1.msra.mxu0 0.0
    %868 = vmatprep.subr.mxu0 0.0
    %869 = vmatpush1.msra.mxu0 0.0
    %870 = vmatprep.subr.mxu0 0.0
    %871 = vmatpush1.msra.mxu0 0.0
    %872 = vmatprep.subr.mxu0 0.0
    %873 = vmatpush1.msra.mxu0 0.0
    %874 = vmatprep.subr.mxu0 0.0
    %875 = vmatpush1.msra.mxu0 0.0
    %876 = vmatprep.subr.mxu0 0.0
    %877 = vmatpush1.msra.mxu0 0.0
    %878 = vmatprep.subr.mxu0 0.0
    %879 = vmatpush1.msra.mxu0 0.0
    %880 = vmatprep.subr.mxu0 0.0
    %881 = vmatpush1.msra.mxu0 0.0
    %882 = vmatprep.subr.mxu0 0.0
    %883 = vmatpush1.msra.mxu0 0.0
    %884 = vmatprep.subr.mxu0 0.0
    %885 = vmatpush1.msra.mxu0 0.0
    %886 = vmatprep.subr.mxu0 0.0
    %887 = vmatpush1.msra.mxu0 0.0
    %888 = vmatprep.subr.mxu0 0.0
    %889 = vmatpush1.msra.mxu0 0.0
    %890 = vmatprep.subr.mxu0 0.0
    %891 = vmatpush1.msra.mxu0 0.0
    %892 = vmatprep.subr.mxu0 0.0
    %893 = vmatpush1.msra.mxu0 0.0
    %894 = vmatprep.subr.mxu0 0.0
    %895 = vmatpush1.msra.mxu0 0.0
    %896 = vmatprep.subr.mxu0 0.0
    %897 = vmatpush1.msra.mxu0 0.0
    %898 = vmatprep.subr.mxu0 0.0
    %899 = vmatpush1.msra.mxu0 0.0
    %900 = vmatprep.subr.mxu0 0.0
    %901 = vmatpush1.msra.mxu0 0.0
    %902 = vmatprep.subr.mxu0 0.0
    %903 = vmatpush1.msra.mxu0 0.0
    %904 = vmatprep.subr.mxu0 0.0
    %905 = vmatpush1.msra.mxu0 0.0
    %906 = vmatprep.mubr.f32.mxu0 0.0
    %907 = vmatmul.mubr.f32.gmra.mrb[0].mxu0 %v816
    %v908 = vpop.f32.mrb[0].mxu0
    %v909 = vadd.f32 0.0, %v908
    %v910 = vpop.f32.mrb[0].mxu0
    %911 = vmatprep.mubr.f32.mxu0 0.0
    %912 = vmatmul.mubr.f32.gmra.mrb[0].mxu0 %v819
    %v913 = vpop.f32.mrb[0].mxu0
    %v914 = vadd.f32 0.0, %v913
    %v915 = vpop.f32.mrb[0].mxu0
    %916 = vmatprep.mubr.f32.mxu0 0.0
    %917 = vmatmul.mubr.f32.gmra.mrb[0].mxu0 %v822
    %v918 = vpop.f32.mrb[0].mxu0
    %v919 = vadd.f32 0.0, %v918
    %v920 = vpop.f32.mrb[0].mxu0
    %921 = vmatprep.mubr.f32.mxu0 0.0
    %922 = vmatmul.mubr.f32.gmra.mrb[0].mxu0 %v825
    %v923 = vpop.f32.mrb[0].mxu0
    %v924 = vadd.f32 0.0, %v923
    %v925 = vpop.f32.mrb[0].mxu0
    %926 = vmatprep.mubr.f32.mxu0 0.0
    %927 = vmatmul.mubr.f32.gmra.mrb[0].mxu0 %v828
    %v928 = vpop.f32.mrb[0].mxu0
    %v929 = vadd.f32 0.0, %v928
    %v930 = vpop.f32.mrb[0].mxu0
    %931 = vmatprep.mubr.f32.mxu0 0.0
    %932 = vmatmul.mubr.f32.gmra.mrb[0].mxu0 %v831
    %v933 = vpop.f32.mrb[0].mxu0
    %v934 = vadd.f32 0.0, %v933
    %v935 = vpop.f32.mrb[0].mxu0
    %936 = vmatprep.mubr.f32.mxu0 0.0
    %937 = vmatmul.mubr.f32.gmra.mrb[0].mxu0 %v834
    %v938 = vpop.f32.mrb[0].mxu0
    %v939 = vadd.f32 0.0, %v938
    %v940 = vpop.f32.mrb[0].mxu0
    %941 = vmatprep.mubr.f32.mxu0 0.0
    %942 = vmatmul.mubr.f32.gmra.mrb[0].mxu0 %v837
    %v943 = vpop.f32.mrb[0].mxu0
    %v944 = vadd.f32 0.0, %v943
    %v945 = vpop.f32.mrb[0].mxu0
    %946 = vmatprep.mubr.f32.mxu0 0.0
    %947 = vmatmul.mubr.f32.gmra.mrb[0].mxu0 %v840
    %v948 = vpop.f32.mrb[0].mxu0
    %v949 = vadd.f32 0.0, %v948
    %v950 = vpop.f32.mrb[0].mxu0
    %951 = vdwg.mxu0
    %vm952 = vcmask 523264
    %v954 = vsel %vm952, %v786, 0
    %v957 = vsel %vm952, %v787, 0
    %v960 = vsel %vm952, %v788, 0
    %v963 = vsel %vm952, %v789, 0
    %v966 = vsel %vm952, %v790, 0
    %v969 = vsel %vm952, %v791, 0
    %v972 = vsel %vm952, %v792, 0
    %v975 = vsel %vm952, %v793, 0
    %v978 = vsel %vm952, %v794, 0
    %980 = vmatprep.subr.mxu0 0.0
    %981 = vmatpush1.msra.mxu0 %v804
    %982 = vmatprep.subr.mxu0 0.0
    %983 = vmatpush1.msra.mxu0 %v805
    %984 = vmatprep.subr.mxu0 0.0
    %985 = vmatpush1.msra.mxu0 %v806
    %986 = vmatprep.subr.mxu0 0.0
    %987 = vmatpush1.msra.mxu0 %v807
    %988 = vmatprep.subr.mxu0 0.0
    %989 = vmatpush1.msra.mxu0 %v808
    %990 = vmatprep.subr.mxu0 0.0
    %991 = vmatpush1.msra.mxu0 %v809
    %992 = vmatprep.subr.mxu0 0.0
    %993 = vmatpush1.msra.mxu0 %v810
    %994 = vmatprep.subr.mxu0 0.0
    %995 = vmatpush1.msra.mxu0 %v811
    %996 = vmatprep.subr.mxu0 0.0
    %997 = vmatpush1.msra.mxu0 0.0
    %998 = vmatprep.subr.mxu0 0.0
    %999 = vmatpush1.msra.mxu0 0.0
    %1000 = vmatprep.subr.mxu0 0.0
    %1001 = vmatpush1.msra.mxu0 0.0
    %1002 = vmatprep.subr.mxu0 0.0
    %1003 = vmatpush1.msra.mxu0 0.0
    %1004 = vmatprep.subr.mxu0 0.0
    %1005 = vmatpush1.msra.mxu0 0.0
    %1006 = vmatprep.subr.mxu0 0.0
    %1007 = vmatpush1.msra.mxu0 0.0
    %1008 = vmatprep.subr.mxu0 0.0
    %1009 = vmatpush1.msra.mxu0 0.0
    %1010 = vmatprep.subr.mxu0 0.0
    %1011 = vmatpush1.msra.mxu0 0.0
    %1012 = vmatprep.subr.mxu0 0.0
    %1013 = vmatpush1.msra.mxu0 0.0
    %1014 = vmatprep.subr.mxu0 0.0
    %1015 = vmatpush1.msra.mxu0 0.0
    %1016 = vmatprep.subr.mxu0 0.0
    %1017 = vmatpush1.msra.mxu0 0.0
    %1018 = vmatprep.subr.mxu0 0.0
    %1019 = vmatpush1.msra.mxu0 0.0
    %1020 = vmatprep.subr.mxu0 0.0
    %1021 = vmatpush1.msra.mxu0 0.0
    %1022 = vmatprep.subr.mxu0 0.0
    %1023 = vmatpush1.msra.mxu0 0.0
    %1024 = vmatprep.subr.mxu0 0.0
    %1025 = vmatpush1.msra.mxu0 0.0
    %1026 = vmatprep.subr.mxu0 0.0
    %1027 = vmatpush1.msra.mxu0 0.0
    %1028 = vmatprep.subr.mxu0 0.0
    %1029 = vmatpush1.msra.mxu0 0.0
    %1030 = vmatprep.subr.mxu0 0.0
    %1031 = vmatpush1.msra.mxu0 0.0
    %1032 = vmatprep.subr.mxu0 0.0
    %1033 = vmatpush1.msra.mxu0 0.0
    %1034 = vmatprep.subr.mxu0 0.0
    %1035 = vmatpush1.msra.mxu0 0.0
    %1036 = vmatprep.subr.mxu0 0.0
    %1037 = vmatpush1.msra.mxu0 0.0
    %1038 = vmatprep.subr.mxu0 0.0
    %1039 = vmatpush1.msra.mxu0 0.0
    %1040 = vmatprep.subr.mxu0 0.0
    %1041 = vmatpush1.msra.mxu0 0.0
    %1042 = vmatprep.subr.mxu0 0.0
    %1043 = vmatpush1.msra.mxu0 0.0
    %1044 = vmatprep.mubr.f32.mxu0 0.0
    %1045 = vmatmul.mubr.f32.gmra.mrb[0].mxu0 %v954
    %v1046 = vpop.f32.mrb[0].mxu0
    %v1047 = vadd.f32 %v909, %v1046
    %v1048 = vpop.f32.mrb[0].mxu0
    %1049 = vmatprep.mubr.f32.mxu0 0.0
    %1050 = vmatmul.mubr.f32.gmra.mrb[0].mxu0 %v957
    %v1051 = vpop.f32.mrb[0].mxu0
    %v1052 = vadd.f32 %v914, %v1051
    %v1053 = vpop.f32.mrb[0].mxu0
    %1054 = vmatprep.mubr.f32.mxu0 0.0
    %1055 = vmatmul.mubr.f32.gmra.mrb[0].mxu0 %v960
    %v1056 = vpop.f32.mrb[0].mxu0
    %v1057 = vadd.f32 %v919, %v1056
    %v1058 = vpop.f32.mrb[0].mxu0
    %1059 = vmatprep.mubr.f32.mxu0 0.0
    %1060 = vmatmul.mubr.f32.gmra.mrb[0].mxu0 %v963
    %v1061 = vpop.f32.mrb[0].mxu0
    %v1062 = vadd.f32 %v924, %v1061
    %v1063 = vpop.f32.mrb[0].mxu0
    %1064 = vmatprep.mubr.f32.mxu0 0.0
    %1065 = vmatmul.mubr.f32.gmra.mrb[0].mxu0 %v966
    %v1066 = vpop.f32.mrb[0].mxu0
    %v1067 = vadd.f32 %v929, %v1066
    %v1068 = vpop.f32.mrb[0].mxu0
    %1069 = vmatprep.mubr.f32.mxu0 0.0
    %1070 = vmatmul.mubr.f32.gmra.mrb[0].mxu0 %v969
    %v1071 = vpop.f32.mrb[0].mxu0
    %v1072 = vadd.f32 %v934, %v1071
    %v1073 = vpop.f32.mrb[0].mxu0
    %1074 = vmatprep.mubr.f32.mxu0 0.0
    %1075 = vmatmul.mubr.f32.gmra.mrb[0].mxu0 %v972
    %v1076 = vpop.f32.mrb[0].mxu0
    %v1077 = vadd.f32 %v939, %v1076
    %v1078 = vpop.f32.mrb[0].mxu0
    %1079 = vmatprep.mubr.f32.mxu0 0.0
    %1080 = vmatmul.mubr.f32.gmra.mrb[0].mxu0 %v975
    %v1081 = vpop.f32.mrb[0].mxu0
    %v1082 = vadd.f32 %v944, %v1081
    %v1083 = vpop.f32.mrb[0].mxu0
    %1084 = vmatprep.mubr.f32.mxu0 0.0
    %1085 = vmatmul.mubr.f32.gmra.mrb[0].mxu0 %v978
    %v1086 = vpop.f32.mrb[0].mxu0
    %v1087 = vadd.f32 %v949, %v1086
    %v1088 = vpop.f32.mrb[0].mxu0
    %1089 = vdwg.mxu0
    %1090 = vmatprep.subr.mxu0 0.0
    %1091 = vmatpush1.msra.mxu0 %v813
    %1092 = vmatprep.subr.mxu0 0.0
    %1093 = vmatpush1.msra.mxu0 0.0
    %1094 = vmatprep.subr.mxu0 0.0
    %1095 = vmatpush1.msra.mxu0 0.0
    %1096 = vmatprep.subr.mxu0 0.0
    %1097 = vmatpush1.msra.mxu0 0.0
    %1098 = vmatprep.subr.mxu0 0.0
    %1099 = vmatpush1.msra.mxu0 0.0
    %1100 = vmatprep.subr.mxu0 0.0
    %1101 = vmatpush1.msra.mxu0 0.0
    %1102 = vmatprep.subr.mxu0 0.0
    %1103 = vmatpush1.msra.mxu0 0.0
    %1104 = vmatprep.subr.mxu0 0.0
    %1105 = vmatpush1.msra.mxu0 0.0
    %1106 = vmatprep.subr.mxu0 0.0
    %1107 = vmatpush1.msra.mxu0 0.0
    %1108 = vmatprep.subr.mxu0 0.0
    %1109 = vmatpush1.msra.mxu0 0.0
    %1110 = vmatprep.subr.mxu0 0.0
    %1111 = vmatpush1.msra.mxu0 0.0
    %1112 = vmatprep.subr.mxu0 0.0
    %1113 = vmatpush1.msra.mxu0 0.0
    %1114 = vmatprep.subr.mxu0 0.0
    %1115 = vmatpush1.msra.mxu0 0.0
    %1116 = vmatprep.subr.mxu0 0.0
    %1117 = vmatpush1.msra.mxu0 0.0
    %1118 = vmatprep.subr.mxu0 0.0
    %1119 = vmatpush1.msra.mxu0 0.0
    %1120 = vmatprep.subr.mxu0 0.0
    %1121 = vmatpush1.msra.mxu0 0.0
    %1122 = vmatprep.subr.mxu0 0.0
    %1123 = vmatpush1.msra.mxu0 0.0
    %1124 = vmatprep.subr.mxu0 0.0
    %1125 = vmatpush1.msra.mxu0 0.0
    %1126 = vmatprep.subr.mxu0 0.0
    %1127 = vmatpush1.msra.mxu0 0.0
    %1128 = vmatprep.subr.mxu0 0.0
    %1129 = vmatpush1.msra.mxu0 0.0
    %1130 = vmatprep.subr.mxu0 0.0
    %1131 = vmatpush1.msra.mxu0 0.0
    %1132 = vmatprep.subr.mxu0 0.0
    %1133 = vmatpush1.msra.mxu0 0.0
    %1134 = vmatprep.subr.mxu0 0.0
    %1135 = vmatpush1.msra.mxu0 0.0
    %1136 = vmatprep.subr.mxu0 0.0
    %1137 = vmatpush1.msra.mxu0 0.0
    %1138 = vmatprep.subr.mxu0 0.0
    %1139 = vmatpush1.msra.mxu0 0.0
    %1140 = vmatprep.subr.mxu0 0.0
    %1141 = vmatpush1.msra.mxu0 0.0
    %1142 = vmatprep.subr.mxu0 0.0
    %1143 = vmatpush1.msra.mxu0 0.0
    %1144 = vmatprep.subr.mxu0 0.0
    %1145 = vmatpush1.msra.mxu0 0.0
    %1146 = vmatprep.subr.mxu0 0.0
    %1147 = vmatpush1.msra.mxu0 0.0
    %1148 = vmatprep.subr.mxu0 0.0
    %1149 = vmatpush1.msra.mxu0 0.0
    %1150 = vmatprep.subr.mxu0 0.0
    %1151 = vmatpush1.msra.mxu0 0.0
    %1152 = vmatprep.subr.mxu0 0.0
    %1153 = vmatpush1.msra.mxu0 0.0
    %1154 = vmatprep.mubr.f32.mxu0 0.0
    %1155 = vmatmul.mubr.f32.gmra.mrb[0].mxu0 %v147
    %v1156 = vpop.f32.mrb[0].mxu0
    %v1157 = vadd.f32 0.0, %v1156
    %v1158 = vpop.f32.mrb[0].mxu0
    %1159 = vmatprep.mubr.f32.mxu0 0.0
    %1160 = vmatmul.mubr.f32.gmra.mrb[0].mxu0 %v150
    %v1161 = vpop.f32.mrb[0].mxu0
    %v1162 = vadd.f32 0.0, %v1161
    %v1163 = vpop.f32.mrb[0].mxu0
    %1164 = vmatprep.mubr.f32.mxu0 0.0
    %1165 = vmatmul.mubr.f32.gmra.mrb[0].mxu0 %v153
    %v1166 = vpop.f32.mrb[0].mxu0
    %v1167 = vadd.f32 0.0, %v1166
    %v1168 = vpop.f32.mrb[0].mxu0
    %1169 = vmatprep.mubr.f32.mxu0 0.0
    %1170 = vmatmul.mubr.f32.gmra.mrb[0].mxu0 %v156
    %v1171 = vpop.f32.mrb[0].mxu0
    %v1172 = vadd.f32 0.0, %v1171
    %v1173 = vpop.f32.mrb[0].mxu0
    %1174 = vmatprep.mubr.f32.mxu0 0.0
    %1175 = vmatmul.mubr.f32.gmra.mrb[0].mxu0 %v159
    %v1176 = vpop.f32.mrb[0].mxu0
    %v1177 = vadd.f32 0.0, %v1176
    %v1178 = vpop.f32.mrb[0].mxu0
    %1179 = vmatprep.mubr.f32.mxu0 0.0
    %1180 = vmatmul.mubr.f32.gmra.mrb[0].mxu0 %v162
    %v1181 = vpop.f32.mrb[0].mxu0
    %v1182 = vadd.f32 0.0, %v1181
    %v1183 = vpop.f32.mrb[0].mxu0
    %1184 = vmatprep.mubr.f32.mxu0 0.0
    %1185 = vmatmul.mubr.f32.gmra.mrb[0].mxu0 %v165
    %v1186 = vpop.f32.mrb[0].mxu0
    %v1187 = vadd.f32 0.0, %v1186
    %v1188 = vpop.f32.mrb[0].mxu0
    %1189 = vmatprep.mubr.f32.mxu0 0.0
    %1190 = vmatmul.mubr.f32.gmra.mrb[0].mxu0 %v168
    %v1191 = vpop.f32.mrb[0].mxu0
    %v1192 = vadd.f32 0.0, %v1191
    %v1193 = vpop.f32.mrb[0].mxu0
    %1194 = vmatprep.mubr.f32.mxu0 0.0
    %1195 = vmatmul.mubr.f32.gmra.mrb[0].mxu0 %v171
    %v1196 = vpop.f32.mrb[0].mxu0
    %v1197 = vadd.f32 0.0, %v1196
    %v1198 = vpop.f32.mrb[0].mxu0
    %1199 = vdwg.mxu0
    %v1200 = vadd.f32 %v1047, %v1157
    %v1201 = vadd.f32 %v1052, %v1162
    %v1202 = vadd.f32 %v1057, %v1167
    %v1203 = vadd.f32 %v1062, %v1172
    %v1204 = vadd.f32 %v1067, %v1177
    %v1205 = vadd.f32 %v1072, %v1182
    %v1206 = vadd.f32 %v1077, %v1187
    %v1207 = vadd.f32 %v1082, %v1192
    %v1208 = vadd.f32 %v1087, %v1197
    %v1209 = vlaneseq
    %v1210 = vshrl.u32 %v1209, 7
    %v1211 = vsub.s32 0, %v1210
    %v1212 = vrot.slane %v814, %v1211
    %v1213 = vadd.f32 %v1200, %v1212
    %v1214 = vadd.f32 %v1201, %v1212
    %v1215 = vadd.f32 %v1202, %v1212
    %v1216 = vadd.f32 %v1203, %v1212
    %v1217 = vadd.f32 %v1204, %v1212
    %v1218 = vadd.f32 %v1205, %v1212
    %v1219 = vadd.f32 %v1206, %v1212
    %v1220 = vadd.f32 %v1207, %v1212
    %v1221 = vadd.f32 %v1208, %v1212
    %vm1222 = vcmp.ge.f32.partialorder %v1213, 0.0
    %vm1223 = vcmp.ge.f32.partialorder %v1214, 0.0
    %vm1224 = vcmp.ge.f32.partialorder %v1215, 0.0
    %vm1225 = vcmp.ge.f32.partialorder %v1216, 0.0
    %vm1226 = vcmp.ge.f32.partialorder %v1217, 0.0
    %vm1227 = vcmp.ge.f32.partialorder %v1218, 0.0
    %vm1228 = vcmp.ge.f32.partialorder %v1219, 0.0
    %vm1229 = vcmp.ge.f32.partialorder %v1220, 0.0
    %vm1230 = vcmp.ge.f32.partialorder %v1221, 0.0
    %v1231 = vmul.f32 %v1213, 0.1
    %v1232 = vmul.f32 %v1214, 0.1
    %v1233 = vmul.f32 %v1215, 0.1
    %v1234 = vmul.f32 %v1216, 0.1
    %v1235 = vmul.f32 %v1217, 0.1
    %v1236 = vmul.f32 %v1218, 0.1
    %v1237 = vmul.f32 %v1219, 0.1
    %v1238 = vmul.f32 %v1220, 0.1
    %v1239 = vmul.f32 %v1221, 0.1
    %v1240 = vsel %vm1222, %v1213, %v1231
    %v1241 = vsel %vm1223, %v1214, %v1232
    %v1242 = vsel %vm1224, %v1215, %v1233
    %v1243 = vsel %vm1225, %v1216, %v1234
    %v1244 = vsel %vm1226, %v1217, %v1235
    %v1245 = vsel %vm1227, %v1218, %v1236
    %v1246 = vsel %vm1228, %v1219, %v1237
    %v1247 = vsel %vm1229, %v1220, %v1238
    %v1248 = vsel %vm1230, %v1221, %v1239
    %v1249 = vld [vmem:[%s5] sm:$0xff]
    %v1250 = vld [vmem:[%s6] sm:$0x1]
    %v1252 = vlaneseq
    %v1253 = vshrl.u32 %v1252, 7
    %v1254 = vsub.s32 0, %v1253
    %v1255 = vrot.slane %v1250, %v1254
    %v1258 = vsel %vm145, %v1240, 0
    %v1261 = vsel %vm145, %v1241, 0
    %v1264 = vsel %vm145, %v1242, 0
    %v1267 = vsel %vm145, %v1243, 0
    %v1270 = vsel %vm145, %v1244, 0
    %v1273 = vsel %vm145, %v1245, 0
    %v1276 = vsel %vm145, %v1246, 0
    %v1279 = vsel %vm145, %v1247, 0
    %v1282 = vsel %vm145, %v1248, 0
    %1284 = vmatprep.subr.mxu0 0.0
    %1285 = vmatpush1.msra.mxu0 %v1249
    %1286 = vmatprep.subr.mxu0 0.0
    %1287 = vmatpush1.msra.mxu0 0.0
    %1288 = vmatprep.subr.mxu0 0.0
    %1289 = vmatpush1.msra.mxu0 0.0
    %1290 = vmatprep.subr.mxu0 0.0
    %1291 = vmatpush1.msra.mxu0 0.0
    %1292 = vmatprep.subr.mxu0 0.0
    %1293 = vmatpush1.msra.mxu0 0.0
    %1294 = vmatprep.subr.mxu0 0.0
    %1295 = vmatpush1.msra.mxu0 0.0
    %1296 = vmatprep.subr.mxu0 0.0
    %1297 = vmatpush1.msra.mxu0 0.0
    %1298 = vmatprep.subr.mxu0 0.0
    %1299 = vmatpush1.msra.mxu0 0.0
    %1300 = vmatprep.subr.mxu0 0.0
    %1301 = vmatpush1.msra.mxu0 0.0
    %1302 = vmatprep.subr.mxu0 0.0
    %1303 = vmatpush1.msra.mxu0 0.0
    %1304 = vmatprep.subr.mxu0 0.0
    %1305 = vmatpush1.msra.mxu0 0.0
    %1306 = vmatprep.subr.mxu0 0.0
    %1307 = vmatpush1.msra.mxu0 0.0
    %1308 = vmatprep.subr.mxu0 0.0
    %1309 = vmatpush1.msra.mxu0 0.0
    %1310 = vmatprep.subr.mxu0 0.0
    %1311 = vmatpush1.msra.mxu0 0.0
    %1312 = vmatprep.subr.mxu0 0.0
    %1313 = vmatpush1.msra.mxu0 0.0
    %1314 = vmatprep.subr.mxu0 0.0
    %1315 = vmatpush1.msra.mxu0 0.0
    %1316 = vmatprep.subr.mxu0 0.0
    %1317 = vmatpush1.msra.mxu0 0.0
    %1318 = vmatprep.subr.mxu0 0.0
    %1319 = vmatpush1.msra.mxu0 0.0
    %1320 = vmatprep.subr.mxu0 0.0
    %1321 = vmatpush1.msra.mxu0 0.0
    %1322 = vmatprep.subr.mxu0 0.0
    %1323 = vmatpush1.msra.mxu0 0.0
    %1324 = vmatprep.subr.mxu0 0.0
    %1325 = vmatpush1.msra.mxu0 0.0
    %1326 = vmatprep.subr.mxu0 0.0
    %1327 = vmatpush1.msra.mxu0 0.0
    %1328 = vmatprep.subr.mxu0 0.0
    %1329 = vmatpush1.msra.mxu0 0.0
    %1330 = vmatprep.subr.mxu0 0.0
    %1331 = vmatpush1.msra.mxu0 0.0
    %1332 = vmatprep.subr.mxu0 0.0
    %1333 = vmatpush1.msra.mxu0 0.0
    %1334 = vmatprep.subr.mxu0 0.0
    %1335 = vmatpush1.msra.mxu0 0.0
    %1336 = vmatprep.subr.mxu0 0.0
    %1337 = vmatpush1.msra.mxu0 0.0
    %1338 = vmatprep.subr.mxu0 0.0
    %1339 = vmatpush1.msra.mxu0 0.0
    %1340 = vmatprep.subr.mxu0 0.0
    %1341 = vmatpush1.msra.mxu0 0.0
    %1342 = vmatprep.subr.mxu0 0.0
    %1343 = vmatpush1.msra.mxu0 0.0
    %1344 = vmatprep.subr.mxu0 0.0
    %1345 = vmatpush1.msra.mxu0 0.0
    %1346 = vmatprep.subr.mxu0 0.0
    %1347 = vmatpush1.msra.mxu0 0.0
    %1348 = vmatprep.mubr.f32.mxu0 0.0
    %1349 = vmatmul.mubr.f32.gmra.mrb[0].mxu0 %v1258
    %v1350 = vpop.f32.mrb[0].mxu0
    %v1351 = vadd.f32 %v1255, %v1350
    %v1352 = vpop.f32.mrb[0].mxu0
    %1353 = vmatprep.mubr.f32.mxu0 0.0
    %1354 = vmatmul.mubr.f32.gmra.mrb[0].mxu0 %v1261
    %v1355 = vpop.f32.mrb[0].mxu0
    %v1356 = vadd.f32 %v1255, %v1355
    %v1357 = vpop.f32.mrb[0].mxu0
    %1358 = vmatprep.mubr.f32.mxu0 0.0
    %1359 = vmatmul.mubr.f32.gmra.mrb[0].mxu0 %v1264
    %v1360 = vpop.f32.mrb[0].mxu0
    %v1361 = vadd.f32 %v1255, %v1360
    %v1362 = vpop.f32.mrb[0].mxu0
    %1363 = vmatprep.mubr.f32.mxu0 0.0
    %1364 = vmatmul.mubr.f32.gmra.mrb[0].mxu0 %v1267
    %v1365 = vpop.f32.mrb[0].mxu0
    %v1366 = vadd.f32 %v1255, %v1365
    %v1367 = vpop.f32.mrb[0].mxu0
    %1368 = vmatprep.mubr.f32.mxu0 0.0
    %1369 = vmatmul.mubr.f32.gmra.mrb[0].mxu0 %v1270
    %v1370 = vpop.f32.mrb[0].mxu0
    %v1371 = vadd.f32 %v1255, %v1370
    %v1372 = vpop.f32.mrb[0].mxu0
    %1373 = vmatprep.mubr.f32.mxu0 0.0
    %1374 = vmatmul.mubr.f32.gmra.mrb[0].mxu0 %v1273
    %v1375 = vpop.f32.mrb[0].mxu0
    %v1376 = vadd.f32 %v1255, %v1375
    %v1377 = vpop.f32.mrb[0].mxu0
    %1378 = vmatprep.mubr.f32.mxu0 0.0
    %1379 = vmatmul.mubr.f32.gmra.mrb[0].mxu0 %v1276
    %v1380 = vpop.f32.mrb[0].mxu0
    %v1381 = vadd.f32 %v1255, %v1380
    %v1382 = vpop.f32.mrb[0].mxu0
    %1383 = vmatprep.mubr.f32.mxu0 0.0
    %1384 = vmatmul.mubr.f32.gmra.mrb[0].mxu0 %v1279
    %v1385 = vpop.f32.mrb[0].mxu0
    %v1386 = vadd.f32 %v1255, %v1385
    %v1387 = vpop.f32.mrb[0].mxu0
    %1388 = vmatprep.mubr.f32.mxu0 0.0
    %1389 = vmatmul.mubr.f32.gmra.mrb[0].mxu0 %v1282
    %v1390 = vpop.f32.mrb[0].mxu0
    %v1391 = vadd.f32 %v1255, %v1390
    %v1392 = vpop.f32.mrb[0].mxu0
    %1393 = vdwg.mxu0
    %vm1394 = vcmp.ge.f32.partialorder %v1351, 0.0
    %vm1395 = vcmp.ge.f32.partialorder %v1356, 0.0
    %vm1396 = vcmp.ge.f32.partialorder %v1361, 0.0
    %vm1397 = vcmp.ge.f32.partialorder %v1366, 0.0
    %vm1398 = vcmp.ge.f32.partialorder %v1371, 0.0
    %vm1399 = vcmp.ge.f32.partialorder %v1376, 0.0
    %vm1400 = vcmp.ge.f32.partialorder %v1381, 0.0
    %vm1401 = vcmp.ge.f32.partialorder %v1386, 0.0
    %vm1402 = vcmp.ge.f32.partialorder %v1391, 0.0
    %v1403 = vmul.f32 %v1351, 0.1
    %v1404 = vmul.f32 %v1356, 0.1
    %v1405 = vmul.f32 %v1361, 0.1
    %v1406 = vmul.f32 %v1366, 0.1
    %v1407 = vmul.f32 %v1371, 0.1
    %v1408 = vmul.f32 %v1376, 0.1
    %v1409 = vmul.f32 %v1381, 0.1
    %v1410 = vmul.f32 %v1386, 0.1
    %v1411 = vmul.f32 %v1391, 0.1
    %v1412 = vsel %vm1394, %v1351, %v1403
    %v1413 = vsel %vm1395, %v1356, %v1404
    %v1414 = vsel %vm1396, %v1361, %v1405
    %v1415 = vsel %vm1397, %v1366, %v1406
    %v1416 = vsel %vm1398, %v1371, %v1407
    %v1417 = vsel %vm1399, %v1376, %v1408
    %v1418 = vsel %vm1400, %v1381, %v1409
    %v1419 = vsel %vm1401, %v1386, %v1410
    %v1420 = vsel %vm1402, %v1391, %v1411
    %v1421 = vld [vmem:[%s7] sm:$0xff]
    %v1422 = vld [vmem:[%s7 + $0x8] sm:$0xff]
    %v1423 = vld [vmem:[%s8] sm:$0x1]
    %v1425 = vlaneseq
    %v1426 = vshrl.u32 %v1425, 7
    %v1427 = vsub.s32 0, %v1426
    %v1428 = vrot.slane %v1423, %v1427
    %vm1430 = vcmask 130048
    %v1432 = vsel %vm1430, %v1412, 0
    %v1435 = vsel %vm1430, %v1413, 0
    %v1438 = vsel %vm1430, %v1414, 0
    %v1441 = vsel %vm1430, %v1415, 0
    %v1444 = vsel %vm1430, %v1416, 0
    %v1447 = vsel %vm1430, %v1417, 0
    %v1450 = vsel %vm1430, %v1418, 0
    %v1453 = vsel %vm1430, %v1419, 0
    %v1456 = vsel %vm1430, %v1420, 0
    %1458 = vmatprep.subr.mxu0 0.0
    %1459 = vmatpush1.msra.mxu0 %v1421
    %1460 = vmatprep.subr.mxu0 0.0
    %1461 = vmatpush1.msra.mxu0 %v1422
    %1462 = vmatprep.subr.mxu0 0.0
    %1463 = vmatpush1.msra.mxu0 0.0
    %1464 = vmatprep.subr.mxu0 0.0
    %1465 = vmatpush1.msra.mxu0 0.0
    %1466 = vmatprep.subr.mxu0 0.0
    %1467 = vmatpush1.msra.mxu0 0.0
    %1468 = vmatprep.subr.mxu0 0.0
    %1469 = vmatpush1.msra.mxu0 0.0
    %1470 = vmatprep.subr.mxu0 0.0
    %1471 = vmatpush1.msra.mxu0 0.0
    %1472 = vmatprep.subr.mxu0 0.0
    %1473 = vmatpush1.msra.mxu0 0.0
    %1474 = vmatprep.subr.mxu0 0.0
    %1475 = vmatpush1.msra.mxu0 0.0
    %1476 = vmatprep.subr.mxu0 0.0
    %1477 = vmatpush1.msra.mxu0 0.0
    %1478 = vmatprep.subr.mxu0 0.0
    %1479 = vmatpush1.msra.mxu0 0.0
    %1480 = vmatprep.subr.mxu0 0.0
    %1481 = vmatpush1.msra.mxu0 0.0
    %1482 = vmatprep.subr.mxu0 0.0
    %1483 = vmatpush1.msra.mxu0 0.0
    %1484 = vmatprep.subr.mxu0 0.0
    %1485 = vmatpush1.msra.mxu0 0.0
    %1486 = vmatprep.subr.mxu0 0.0
    %1487 = vmatpush1.msra.mxu0 0.0
    %1488 = vmatprep.subr.mxu0 0.0
    %1489 = vmatpush1.msra.mxu0 0.0
    %1490 = vmatprep.subr.mxu0 0.0
    %1491 = vmatpush1.msra.mxu0 0.0
    %1492 = vmatprep.subr.mxu0 0.0
    %1493 = vmatpush1.msra.mxu0 0.0
    %1494 = vmatprep.subr.mxu0 0.0
    %1495 = vmatpush1.msra.mxu0 0.0
    %1496 = vmatprep.subr.mxu0 0.0
    %1497 = vmatpush1.msra.mxu0 0.0
    %1498 = vmatprep.subr.mxu0 0.0
    %1499 = vmatpush1.msra.mxu0 0.0
    %1500 = vmatprep.subr.mxu0 0.0
    %1501 = vmatpush1.msra.mxu0 0.0
    %1502 = vmatprep.subr.mxu0 0.0
    %1503 = vmatpush1.msra.mxu0 0.0
    %1504 = vmatprep.subr.mxu0 0.0
    %1505 = vmatpush1.msra.mxu0 0.0
    %1506 = vmatprep.subr.mxu0 0.0
    %1507 = vmatpush1.msra.mxu0 0.0
    %1508 = vmatprep.subr.mxu0 0.0
    %1509 = vmatpush1.msra.mxu0 0.0
    %1510 = vmatprep.subr.mxu0 0.0
    %1511 = vmatpush1.msra.mxu0 0.0
    %1512 = vmatprep.subr.mxu0 0.0
    %1513 = vmatpush1.msra.mxu0 0.0
    %1514 = vmatprep.subr.mxu0 0.0
    %1515 = vmatpush1.msra.mxu0 0.0
    %1516 = vmatprep.subr.mxu0 0.0
    %1517 = vmatpush1.msra.mxu0 0.0
    %1518 = vmatprep.subr.mxu0 0.0
    %1519 = vmatpush1.msra.mxu0 0.0
    %1520 = vmatprep.subr.mxu0 0.0
    %1521 = vmatpush1.msra.mxu0 0.0
    %1522 = vmatprep.mubr.f32.mxu0 0.0
    %1523 = vmatmul.mubr.f32.gmra.mrb[0].mxu0 %v1432
    %v1524 = vpop.f32.mrb[0].mxu0
    %v1525 = vadd.f32 %v1428, %v1524
    %v1526 = vpop.f32.mrb[0].mxu0
    %1527 = vmatprep.mubr.f32.mxu0 0.0
    %1528 = vmatmul.mubr.f32.gmra.mrb[0].mxu0 %v1435
    %v1529 = vpop.f32.mrb[0].mxu0
    %v1530 = vadd.f32 %v1428, %v1529
    %v1531 = vpop.f32.mrb[0].mxu0
    %1532 = vmatprep.mubr.f32.mxu0 0.0
    %1533 = vmatmul.mubr.f32.gmra.mrb[0].mxu0 %v1438
    %v1534 = vpop.f32.mrb[0].mxu0
    %v1535 = vadd.f32 %v1428, %v1534
    %v1536 = vpop.f32.mrb[0].mxu0
    %1537 = vmatprep.mubr.f32.mxu0 0.0
    %1538 = vmatmul.mubr.f32.gmra.mrb[0].mxu0 %v1441
    %v1539 = vpop.f32.mrb[0].mxu0
    %v1540 = vadd.f32 %v1428, %v1539
    %v1541 = vpop.f32.mrb[0].mxu0
    %1542 = vmatprep.mubr.f32.mxu0 0.0
    %1543 = vmatmul.mubr.f32.gmra.mrb[0].mxu0 %v1444
    %v1544 = vpop.f32.mrb[0].mxu0
    %v1545 = vadd.f32 %v1428, %v1544
    %v1546 = vpop.f32.mrb[0].mxu0
    %1547 = vmatprep.mubr.f32.mxu0 0.0
    %1548 = vmatmul.mubr.f32.gmra.mrb[0].mxu0 %v1447
    %v1549 = vpop.f32.mrb[0].mxu0
    %v1550 = vadd.f32 %v1428, %v1549
    %v1551 = vpop.f32.mrb[0].mxu0
    %1552 = vmatprep.mubr.f32.mxu0 0.0
    %1553 = vmatmul.mubr.f32.gmra.mrb[0].mxu0 %v1450
    %v1554 = vpop.f32.mrb[0].mxu0
    %v1555 = vadd.f32 %v1428, %v1554
    %v1556 = vpop.f32.mrb[0].mxu0
    %1557 = vmatprep.mubr.f32.mxu0 0.0
    %1558 = vmatmul.mubr.f32.gmra.mrb[0].mxu0 %v1453
    %v1559 = vpop.f32.mrb[0].mxu0
    %v1560 = vadd.f32 %v1428, %v1559
    %v1561 = vpop.f32.mrb[0].mxu0
    %1562 = vmatprep.mubr.f32.mxu0 0.0
    %1563 = vmatmul.mubr.f32.gmra.mrb[0].mxu0 %v1456
    %v1564 = vpop.f32.mrb[0].mxu0
    %v1565 = vadd.f32 %v1428, %v1564
    %v1566 = vpop.f32.mrb[0].mxu0
    %1567 = vdwg.mxu0
    %vm1568 = vcmp.ge.f32.partialorder %v1525, 0.0
    %vm1569 = vcmp.ge.f32.partialorder %v1530, 0.0
    %vm1570 = vcmp.ge.f32.partialorder %v1535, 0.0
    %vm1571 = vcmp.ge.f32.partialorder %v1540, 0.0
    %vm1572 = vcmp.ge.f32.partialorder %v1545, 0.0
    %vm1573 = vcmp.ge.f32.partialorder %v1550, 0.0
    %vm1574 = vcmp.ge.f32.partialorder %v1555, 0.0
    %vm1575 = vcmp.ge.f32.partialorder %v1560, 0.0
    %vm1576 = vcmp.ge.f32.partialorder %v1565, 0.0
    %v1577 = vmul.f32 %v1525, 0.1
    %v1578 = vmul.f32 %v1530, 0.1
    %v1579 = vmul.f32 %v1535, 0.1
    %v1580 = vmul.f32 %v1540, 0.1
    %v1581 = vmul.f32 %v1545, 0.1
    %v1582 = vmul.f32 %v1550, 0.1
    %v1583 = vmul.f32 %v1555, 0.1
    %v1584 = vmul.f32 %v1560, 0.1
    %v1585 = vmul.f32 %v1565, 0.1
    %v1586 = vsel %vm1568, %v1525, %v1577
    %v1587 = vsel %vm1569, %v1530, %v1578
    %v1588 = vsel %vm1570, %v1535, %v1579
    %v1589 = vsel %vm1571, %v1540, %v1580
    %v1590 = vsel %vm1572, %v1545, %v1581
    %v1591 = vsel %vm1573, %v1550, %v1582
    %v1592 = vsel %vm1574, %v1555, %v1583
    %v1593 = vsel %vm1575, %v1560, %v1584
    %v1594 = vsel %vm1576, %v1565, %v1585
    %v1595 = vmul.f32 %v1586, 100.0
    %v1596 = vmul.f32 %v1587, 100.0
    %v1597 = vmul.f32 %v1588, 100.0
    %v1598 = vmul.f32 %v1589, 100.0
    %v1599 = vmul.f32 %v1590, 100.0
    %v1600 = vmul.f32 %v1591, 100.0
    %v1601 = vmul.f32 %v1592, 100.0
    %v1602 = vmul.f32 %v1593, 100.0
    %v1603 = vmul.f32 %v1594, 100.0
    %vm1604 = vcmp.gt.f32.partialorder %v1595, 20.0
    %vm1605 = vcmp.gt.f32.partialorder %v1596, 20.0
    %vm1606 = vcmp.gt.f32.partialorder %v1597, 20.0
    %vm1607 = vcmp.gt.f32.partialorder %v1598, 20.0
    %vm1608 = vcmp.gt.f32.partialorder %v1599, 20.0
    %vm1609 = vcmp.gt.f32.partialorder %v1600, 20.0
    %vm1610 = vcmp.gt.f32.partialorder %v1601, 20.0
    %vm1611 = vcmp.gt.f32.partialorder %v1602, 20.0
    %vm1612 = vcmp.gt.f32.partialorder %v1603, 20.0
    %v1613 = vmin.f32 %v1595, 20.0
    %v1614 = vmin.f32 %v1596, 20.0
    %v1615 = vmin.f32 %v1597, 20.0
    %v1616 = vmin.f32 %v1598, 20.0
    %v1617 = vmin.f32 %v1599, 20.0
    %v1618 = vmin.f32 %v1600, 20.0
    %v1619 = vmin.f32 %v1601, 20.0
    %v1620 = vmin.f32 %v1602, 20.0
    %v1621 = vmin.f32 %v1603, 20.0
    %v1622 = vmul.f32 %v1613, 1.442695
    %v1623 = vpow.pop %v1622
    %v1624 = vmul.f32 %v1614, 1.442695
    %v1625 = vpow.pop %v1624
    %v1626 = vmul.f32 %v1615, 1.442695
    %v1627 = vpow.pop %v1626
    %v1628 = vmul.f32 %v1616, 1.442695
    %v1629 = vpow.pop %v1628
    %v1630 = vmul.f32 %v1617, 1.442695
    %v1631 = vpow.pop %v1630
    %v1632 = vmul.f32 %v1618, 1.442695
    %v1633 = vpow.pop %v1632
    %v1634 = vmul.f32 %v1619, 1.442695
    %v1635 = vpow.pop %v1634
    %v1636 = vmul.f32 %v1620, 1.442695
    %v1637 = vpow.pop %v1636
    %v1638 = vmul.f32 %v1621, 1.442695
    %v1639 = vpow.pop %v1638
    %v1640 = vadd.f32 %v1623, 1.0
    %v1641 = vlog2.pop %v1640
    %v1642 = vmul.f32 %v1641, 0.6931472
    %v1643 = vmul.f32 -0.5, %v1623
    %v1644 = vadd.f32 %v1643, 1.0
    %v1645 = vmul.f32 %v1644, %v1623
    %v1646 = vand.u32 2147483647, %v1623
    %vm1647 = vcmp.lt.f32.partialorder %v1646, 0.0004427343
    %v1648 = vsel %vm1647, %v1645, %v1642
    %v1649 = vadd.f32 %v1625, 1.0
    %v1650 = vlog2.pop %v1649
    %v1651 = vmul.f32 %v1650, 0.6931472
    %v1652 = vmul.f32 -0.5, %v1625
    %v1653 = vadd.f32 %v1652, 1.0
    %v1654 = vmul.f32 %v1653, %v1625
    %v1655 = vand.u32 2147483647, %v1625
    %vm1656 = vcmp.lt.f32.partialorder %v1655, 0.0004427343
    %v1657 = vsel %vm1656, %v1654, %v1651
    %v1658 = vadd.f32 %v1627, 1.0
    %v1659 = vlog2.pop %v1658
    %v1660 = vmul.f32 %v1659, 0.6931472
    %v1661 = vmul.f32 -0.5, %v1627
    %v1662 = vadd.f32 %v1661, 1.0
    %v1663 = vmul.f32 %v1662, %v1627
    %v1664 = vand.u32 2147483647, %v1627
    %vm1665 = vcmp.lt.f32.partialorder %v1664, 0.0004427343
    %v1666 = vsel %vm1665, %v1663, %v1660
    %v1667 = vadd.f32 %v1629, 1.0
    %v1668 = vlog2.pop %v1667
    %v1669 = vmul.f32 %v1668, 0.6931472
    %v1670 = vmul.f32 -0.5, %v1629
    %v1671 = vadd.f32 %v1670, 1.0
    %v1672 = vmul.f32 %v1671, %v1629
    %v1673 = vand.u32 2147483647, %v1629
    %vm1674 = vcmp.lt.f32.partialorder %v1673, 0.0004427343
    %v1675 = vsel %vm1674, %v1672, %v1669
    %v1676 = vadd.f32 %v1631, 1.0
    %v1677 = vlog2.pop %v1676
    %v1678 = vmul.f32 %v1677, 0.6931472
    %v1679 = vmul.f32 -0.5, %v1631
    %v1680 = vadd.f32 %v1679, 1.0
    %v1681 = vmul.f32 %v1680, %v1631
    %v1682 = vand.u32 2147483647, %v1631
    %vm1683 = vcmp.lt.f32.partialorder %v1682, 0.0004427343
    %v1684 = vsel %vm1683, %v1681, %v1678
    %v1685 = vadd.f32 %v1633, 1.0
    %v1686 = vlog2.pop %v1685
    %v1687 = vmul.f32 %v1686, 0.6931472
    %v1688 = vmul.f32 -0.5, %v1633
    %v1689 = vadd.f32 %v1688, 1.0
    %v1690 = vmul.f32 %v1689, %v1633
    %v1691 = vand.u32 2147483647, %v1633
    %vm1692 = vcmp.lt.f32.partialorder %v1691, 0.0004427343
    %v1693 = vsel %vm1692, %v1690, %v1687
    %v1694 = vadd.f32 %v1635, 1.0
    %v1695 = vlog2.pop %v1694
    %v1696 = vmul.f32 %v1695, 0.6931472
    %v1697 = vmul.f32 -0.5, %v1635
    %v1698 = vadd.f32 %v1697, 1.0
    %v1699 = vmul.f32 %v1698, %v1635
    %v1700 = vand.u32 2147483647, %v1635
    %vm1701 = vcmp.lt.f32.partialorder %v1700, 0.0004427343
    %v1702 = vsel %vm1701, %v1699, %v1696
    %v1703 = vadd.f32 %v1637, 1.0
    %v1704 = vlog2.pop %v1703
    %v1705 = vmul.f32 %v1704, 0.6931472
    %v1706 = vmul.f32 -0.5, %v1637
    %v1707 = vadd.f32 %v1706, 1.0
    %v1708 = vmul.f32 %v1707, %v1637
    %v1709 = vand.u32 2147483647, %v1637
    %vm1710 = vcmp.lt.f32.partialorder %v1709, 0.0004427343
    %v1711 = vsel %vm1710, %v1708, %v1705
    %v1712 = vadd.f32 %v1639, 1.0
    %v1713 = vlog2.pop %v1712
    %v1714 = vmul.f32 %v1713, 0.6931472
    %v1715 = vmul.f32 -0.5, %v1639
    %v1716 = vadd.f32 %v1715, 1.0
    %v1717 = vmul.f32 %v1716, %v1639
    %v1718 = vand.u32 2147483647, %v1639
    %vm1719 = vcmp.lt.f32.partialorder %v1718, 0.0004427343
    %v1720 = vsel %vm1719, %v1717, %v1714
    %v1721 = vrcp.pop 100.0
    %v1722 = vmul.f32 %v1648, %v1721
    %v1723 = vmul.f32 %v1657, %v1721
    %v1724 = vmul.f32 %v1666, %v1721
    %v1725 = vmul.f32 %v1675, %v1721
    %v1726 = vmul.f32 %v1684, %v1721
    %v1727 = vmul.f32 %v1693, %v1721
    %v1728 = vmul.f32 %v1702, %v1721
    %v1729 = vmul.f32 %v1711, %v1721
    %v1730 = vmul.f32 %v1720, %v1721
    %v1731 = vsel %vm1604, %v1586, %v1722
    %v1732 = vsel %vm1605, %v1587, %v1723
    %v1733 = vsel %vm1606, %v1588, %v1724
    %v1734 = vsel %vm1607, %v1589, %v1725
    %v1735 = vsel %vm1608, %v1590, %v1726
    %v1736 = vsel %vm1609, %v1591, %v1727
    %v1737 = vsel %vm1610, %v1592, %v1728
    %v1738 = vsel %vm1611, %v1593, %v1729
    %v1739 = vsel %vm1612, %v1594, %v1730
    %vm1740 = vcmask 31744
    %1741 = vst.msk [vmem:[%s12] sm:$0xff] %vm1740, %v1731
    %1742 = vst.msk [vmem:[%s12 + $0x8] sm:$0xff] %vm1740, %v1732
    %1743 = vst.msk [vmem:[%s12 + $0x10] sm:$0xff] %vm1740, %v1733
    %1744 = vst.msk [vmem:[%s12 + $0x18] sm:$0xff] %vm1740, %v1734
    %1745 = vst.msk [vmem:[%s12 + $0x20] sm:$0xff] %vm1740, %v1735
    %1746 = vst.msk [vmem:[%s12 + $0x28] sm:$0xff] %vm1740, %v1736
    %1747 = vst.msk [vmem:[%s12 + $0x30] sm:$0xff] %vm1740, %v1737
    %1748 = vst.msk [vmem:[%s12 + $0x38] sm:$0xff] %vm1740, %v1738
    %1749 = vst.msk [vmem:[%s12 + $0x40] sm:$0xff] %vm1740, %v1739
    %v1750 = vld [vmem:[%s10] sm:$0xff]
    %v1751 = vld [vmem:[%s10 + $0x8] sm:$0xff]
    %v1752 = vld [vmem:[%s10 + $0x10] sm:$0xff]
    %v1753 = vld [vmem:[%s10 + $0x18] sm:$0xff]
    %v1754 = vld [vmem:[%s10 + $0x20] sm:$0xff]
    %v1755 = vld [vmem:[%s10 + $0x28] sm:$0xff]
    %v1756 = vld [vmem:[%s10 + $0x30] sm:$0xff]
    %v1757 = vld [vmem:[%s10 + $0x38] sm:$0xff]
    %v1758 = vld [vmem:[%s10 + $0x40] sm:$0xff]
    %v1759 = vld [vmem:[%s9] sm:$0xff]
    %v1760 = vld [vmem:[%s9 + $0x8] sm:$0xff]
    %v1761 = vld [vmem:[%s9 + $0x10] sm:$0xff]
    %v1762 = vld [vmem:[%s9 + $0x18] sm:$0xff]
    %v1763 = vld [vmem:[%s9 + $0x20] sm:$0xff]
    %v1764 = vld [vmem:[%s9 + $0x28] sm:$0xff]
    %v1765 = vld [vmem:[%s9 + $0x30] sm:$0xff]
    %v1766 = vld [vmem:[%s9 + $0x38] sm:$0xff]
    %v1767 = vld [vmem:[%s9 + $0x40] sm:$0xff]
    %v1768 = vmul.f32 %v1731, %v1759
    %v1769 = vmul.f32 %v1732, %v1760
    %v1770 = vmul.f32 %v1733, %v1761
    %v1771 = vmul.f32 %v1734, %v1762
    %v1772 = vmul.f32 %v1735, %v1763
    %v1773 = vmul.f32 %v1736, %v1764
    %v1774 = vmul.f32 %v1737, %v1765
    %v1775 = vmul.f32 %v1738, %v1766
    %v1776 = vmul.f32 %v1739, %v1767
    %v1777 = vsel %vm1740, %v1768, 0.0
    %1778 = vadd.xlane.f32.xlu0 %v1777
    %v1779 = vpop.xlane.xlu0 %1778
    %v1780 = vsel %vm1740, %v1769, 0.0
    %1781 = vadd.xlane.f32.xlu0 %v1780
    %v1782 = vpop.xlane.xlu0 %1781
    %v1783 = vsel %vm1740, %v1770, 0.0
    %1784 = vadd.xlane.f32.xlu0 %v1783
    %v1785 = vpop.xlane.xlu0 %1784
    %v1786 = vsel %vm1740, %v1771, 0.0
    %1787 = vadd.xlane.f32.xlu0 %v1786
    %v1788 = vpop.xlane.xlu0 %1787
    %v1789 = vsel %vm1740, %v1772, 0.0
    %1790 = vadd.xlane.f32.xlu0 %v1789
    %v1791 = vpop.xlane.xlu0 %1790
    %v1792 = vsel %vm1740, %v1773, 0.0
    %1793 = vadd.xlane.f32.xlu0 %v1792
    %v1794 = vpop.xlane.xlu0 %1793
    %v1795 = vsel %vm1740, %v1774, 0.0
    %1796 = vadd.xlane.f32.xlu0 %v1795
    %v1797 = vpop.xlane.xlu0 %1796
    %v1798 = vsel %vm1740, %v1775, 0.0
    %1799 = vadd.xlane.f32.xlu0 %v1798
    %v1800 = vpop.xlane.xlu0 %1799
    %v1801 = vsel %vm1740, %v1776, 0.0
    %1802 = vadd.xlane.f32.xlu0 %v1801
    %v1803 = vpop.xlane.xlu0 %1802
    %v1804 = vadd.f32 %v1779, 1e-08
    %v1805 = vadd.f32 %v1782, 1e-08
    %v1806 = vadd.f32 %v1785, 1e-08
    %v1807 = vadd.f32 %v1788, 1e-08
    %v1808 = vadd.f32 %v1791, 1e-08
    %v1809 = vadd.f32 %v1794, 1e-08
    %v1810 = vadd.f32 %v1797, 1e-08
    %v1811 = vadd.f32 %v1800, 1e-08
    %v1812 = vadd.f32 %v1803, 1e-08
    %v1813 = vlog2.pop %v1804
    %v1814 = vmul.f32 %v1813, 0.6931472
    %v1815 = vlog2.pop %v1805
    %v1816 = vmul.f32 %v1815, 0.6931472
    %v1817 = vlog2.pop %v1806
    %v1818 = vmul.f32 %v1817, 0.6931472
    %v1819 = vlog2.pop %v1807
    %v1820 = vmul.f32 %v1819, 0.6931472
    %v1821 = vlog2.pop %v1808
    %v1822 = vmul.f32 %v1821, 0.6931472
    %v1823 = vlog2.pop %v1809
    %v1824 = vmul.f32 %v1823, 0.6931472
    %v1825 = vlog2.pop %v1810
    %v1826 = vmul.f32 %v1825, 0.6931472
    %v1827 = vlog2.pop %v1811
    %v1828 = vmul.f32 %v1827, 0.6931472
    %v1829 = vlog2.pop %v1812
    %v1830 = vmul.f32 %v1829, 0.6931472
    %v1831 = vsub.f32 0.0, %v1814
    %v1832 = vsub.f32 0.0, %v1816
    %v1833 = vsub.f32 0.0, %v1818
    %v1834 = vsub.f32 0.0, %v1820
    %v1835 = vsub.f32 0.0, %v1822
    %v1836 = vsub.f32 0.0, %v1824
    %v1837 = vsub.f32 0.0, %v1826
    %v1838 = vsub.f32 0.0, %v1828
    %v1839 = vsub.f32 0.0, %v1830
    %v1840 = vmul.f32 %v1831, %v1750
    %v1841 = vmul.f32 %v1832, %v1751
    %v1842 = vmul.f32 %v1833, %v1752
    %v1843 = vmul.f32 %v1834, %v1753
    %v1844 = vmul.f32 %v1835, %v1754
    %v1845 = vmul.f32 %v1836, %v1755
    %v1846 = vmul.f32 %v1837, %v1756
    %v1847 = vmul.f32 %v1838, %v1757
    %v1848 = vmul.f32 %v1839, %v1758
    %v1849 = vsel %vm1740, %v1731, 0.0
    %1850 = vadd.xlane.f32.xlu0 %v1849
    %v1851 = vpop.xlane.xlu0 %1850
    %v1852 = vsel %vm1740, %v1732, 0.0
    %1853 = vadd.xlane.f32.xlu0 %v1852
    %v1854 = vpop.xlane.xlu0 %1853
    %v1855 = vsel %vm1740, %v1733, 0.0
    %1856 = vadd.xlane.f32.xlu0 %v1855
    %v1857 = vpop.xlane.xlu0 %1856
    %v1858 = vsel %vm1740, %v1734, 0.0
    %1859 = vadd.xlane.f32.xlu0 %v1858
    %v1860 = vpop.xlane.xlu0 %1859
    %v1861 = vsel %vm1740, %v1735, 0.0
    %1862 = vadd.xlane.f32.xlu0 %v1861
    %v1863 = vpop.xlane.xlu0 %1862
    %v1864 = vsel %vm1740, %v1736, 0.0
    %1865 = vadd.xlane.f32.xlu0 %v1864
    %v1866 = vpop.xlane.xlu0 %1865
    %v1867 = vsel %vm1740, %v1737, 0.0
    %1868 = vadd.xlane.f32.xlu0 %v1867
    %v1869 = vpop.xlane.xlu0 %1868
    %v1870 = vsel %vm1740, %v1738, 0.0
    %1871 = vadd.xlane.f32.xlu0 %v1870
    %v1872 = vpop.xlane.xlu0 %1871
    %v1873 = vsel %vm1740, %v1739, 0.0
    %1874 = vadd.xlane.f32.xlu0 %v1873
    %v1875 = vpop.xlane.xlu0 %1874
    %v1876 = vld [vmem:[%s11] sm:$0xff]
    %v1877 = vld [vmem:[%s11 + $0x8] sm:$0xff]
    %v1878 = vld [vmem:[%s11 + $0x10] sm:$0xff]
    %v1879 = vld [vmem:[%s11 + $0x18] sm:$0xff]
    %v1880 = vld [vmem:[%s11 + $0x20] sm:$0xff]
    %v1881 = vld [vmem:[%s11 + $0x28] sm:$0xff]
    %v1882 = vld [vmem:[%s11 + $0x30] sm:$0xff]
    %v1883 = vld [vmem:[%s11 + $0x38] sm:$0xff]
    %v1884 = vld [vmem:[%s11 + $0x40] sm:$0xff]
    %v1885 = vmul.f32 %v1851, %v1876
    %v1886 = vmul.f32 %v1854, %v1877
    %v1887 = vmul.f32 %v1857, %v1878
    %v1888 = vmul.f32 %v1860, %v1879
    %v1889 = vmul.f32 %v1863, %v1880
    %v1890 = vmul.f32 %v1866, %v1881
    %v1891 = vmul.f32 %v1869, %v1882
    %v1892 = vmul.f32 %v1872, %v1883
    %v1893 = vmul.f32 %v1875, %v1884
    %vm1894 = vcmask 7168
    %v1895 = vsel %vm1894, %v1840, 0.0
    %v1896 = vsel %vm1894, %v1841, 0.0
    %v1897 = vadd.f32 %v1895, %v1896
    %v1898 = vsel %vm1894, %v1842, 0.0
    %v1899 = vadd.f32 %v1897, %v1898
    %v1900 = vsel %vm1894, %v1843, 0.0
    %v1901 = vadd.f32 %v1899, %v1900
    %v1902 = vsel %vm1894, %v1844, 0.0
    %v1903 = vadd.f32 %v1901, %v1902
    %v1904 = vsel %vm1894, %v1845, 0.0
    %v1905 = vadd.f32 %v1903, %v1904
    %v1906 = vsel %vm1894, %v1846, 0.0
    %v1907 = vadd.f32 %v1905, %v1906
    %v1908 = vsel %vm1894, %v1847, 0.0
    %v1909 = vadd.f32 %v1907, %v1908
    %v1910 = vsel %vm1894, %v1848, 0.0
    %v1911 = vadd.f32 %v1909, %v1910
    %1912 = vadd.xlane.f32.xlu0 %v1911
    %v1913 = vpop.xlane.xlu0 %1912
    %v1914 = vrot.slane %v1913, 4
    %v1915 = vadd.f32 %v1913, %v1914
    %v1916 = vrot.slane %v1915, 2
    %v1917 = vadd.f32 %v1915, %v1916
    %v1918 = vrot.slane %v1917, 1
    %v1919 = vadd.f32 %v1917, %v1918
    %s1920 = vtos %v1919
    %v1921 = vsel %vm1894, %v1885, 0.0
    %v1922 = vsel %vm1894, %v1886, 0.0
    %v1923 = vadd.f32 %v1921, %v1922
    %v1924 = vsel %vm1894, %v1887, 0.0
    %v1925 = vadd.f32 %v1923, %v1924
    %v1926 = vsel %vm1894, %v1888, 0.0
    %v1927 = vadd.f32 %v1925, %v1926
    %v1928 = vsel %vm1894, %v1889, 0.0
    %v1929 = vadd.f32 %v1927, %v1928
    %v1930 = vsel %vm1894, %v1890, 0.0
    %v1931 = vadd.f32 %v1929, %v1930
    %v1932 = vsel %vm1894, %v1891, 0.0
    %v1933 = vadd.f32 %v1931, %v1932
    %v1934 = vsel %vm1894, %v1892, 0.0
    %v1935 = vadd.f32 %v1933, %v1934
    %v1936 = vsel %vm1894, %v1893, 0.0
    %v1937 = vadd.f32 %v1935, %v1936
    %1938 = vadd.xlane.f32.xlu0 %v1937
    %v1939 = vpop.xlane.xlu0 %1938
    %v1940 = vrot.slane %v1939, 4
    %v1941 = vadd.f32 %v1939, %v1940
    %v1942 = vrot.slane %v1941, 2
    %v1943 = vadd.f32 %v1941, %v1942
    %v1944 = vrot.slane %v1943, 1
    %v1945 = vadd.f32 %v1943, %v1944
    %s1946 = vtos %v1945
    %s1947 = sadd.f32 %s1920, %s1946
    %v1948 = vsel %vm1894, %v1750, 0.0
    %v1949 = vsel %vm1894, %v1751, 0.0
    %v1950 = vadd.f32 %v1948, %v1949
    %v1951 = vsel %vm1894, %v1752, 0.0
    %v1952 = vadd.f32 %v1950, %v1951
    %v1953 = vsel %vm1894, %v1753, 0.0
    %v1954 = vadd.f32 %v1952, %v1953
    %v1955 = vsel %vm1894, %v1754, 0.0
    %v1956 = vadd.f32 %v1954, %v1955
    %v1957 = vsel %vm1894, %v1755, 0.0
    %v1958 = vadd.f32 %v1956, %v1957
    %v1959 = vsel %vm1894, %v1756, 0.0
    %v1960 = vadd.f32 %v1958, %v1959
    %v1961 = vsel %vm1894, %v1757, 0.0
    %v1962 = vadd.f32 %v1960, %v1961
    %v1963 = vsel %vm1894, %v1758, 0.0
    %v1964 = vadd.f32 %v1962, %v1963
    %1965 = vadd.xlane.f32.xlu0 %v1964
    %v1966 = vpop.xlane.xlu0 %1965
    %v1967 = vrot.slane %v1966, 4
    %v1968 = vadd.f32 %v1966, %v1967
    %v1969 = vrot.slane %v1968, 2
    %v1970 = vadd.f32 %v1968, %v1969
    %v1971 = vrot.slane %v1970, 1
    %v1972 = vadd.f32 %v1970, %v1971
    %s1973 = vtos %v1972
    %v1974 = vstv %s1973
    %v1975 = vrcp.pop %v1974
    %s1976 = vtos %v1975
    %s1977 = smul.f32 %s1947, %s1976
    %s1978 = scalar_lea.smem [#allocation2], 0
    %1979 = sst [smem:[%s1978]] %s1977
    // Predicated region
    $region50: #{tpu_custom_call.1} parent=1 // pred_check
      _
    $region51: #{tpu_custom_call.1} parent=1 // pred_check_branch
      %1981 = sbr.rel (0) target = $region53
    $region52: #{tpu_custom_call.1} parent=1 // pred_region
      _
    $region53: #{tpu_custom_call.1} parent=1 // pred_fallthru
      _
    // Predicated region
    $region54: #{tpu_custom_call.1} parent=1 // pred_check
      _
    $region55: #{tpu_custom_call.1} parent=1 // pred_check_branch
      %1983 = sbr.rel (0) target = $region57
    $region56: #{tpu_custom_call.1} parent=1 // pred_region
      %s1985 = ssub.s32 16, 16
      %1986 = vsyncadd [#allocation3], %s1985
      %1989 = dma.smem_to_hbm [#allocation2], 16, %s13, [#allocation3]
    $region57: #{tpu_custom_call.1} parent=1 // pred_fallthru
      _
    // Predicated region
    $region58: #{tpu_custom_call.1} parent=1 // pred_check
      _
    $region59: #{tpu_custom_call.1} parent=1 // pred_check_branch
      %1991 = sbr.rel (0) target = $region61
    $region60: #{tpu_custom_call.1} parent=1 // pred_region
      _
    $region61: #{tpu_custom_call.1} parent=1 // pred_fallthru
      _
    // Predicated region
    $region62: #{tpu_custom_call.1} parent=1 // pred_check
      _
    $region63: #{tpu_custom_call.1} parent=1 // pred_check_branch
      %1993 = sbr.rel (0) target = $region65
    $region64: #{tpu_custom_call.1} parent=1 // pred_region
      %1994 = dma.done [#allocation3], 16
    $region65: #{tpu_custom_call.1} parent=1 // pred_fallthru
      _
    %1995 = sfence
    %1996 = vsyncpa [#allocation3], 1

</llo_original>
